<compile_context>
chip_gen: v5e
topology: v5e:2x2
jax: 0.10.0
libtpu: 0.0.40
codegen_flags: <defaults>
</compile_context>

<pallas_src>
import numpy as np
import jax
import jax.numpy as jnp
from jax import lax
from jax.experimental import pallas as pl
from jax.experimental.pallas import tpu as pltpu

START_TAG = "<START>"
STOP_TAG = "<STOP>"
tag_to_ix = {"WORD": 0, "NAME": 1, "NOTIONAL": 2, "TICKER": 3, START_TAG: 4, STOP_TAG: 5}
START_IDX = tag_to_ix[START_TAG]
STOP_IDX = tag_to_ix[STOP_TAG]

# small, module-consistent sizes
VOCAB = 20            # vocab_size
EMBED = 32            # embedding_dim
HIDDEN = 32           # hidden_dim (bidirectional => HH per direction)
HH = HIDDEN // 2      # 16
TAGS = len(tag_to_ix)  # 6
SEQ = 8               # sentence length
G4 = 4 * HH           # 64  : i,f,g,o stacked for one direction
G8 = 2 * G4           # 128 : [fwd gates | bwd gates]

# ---- packed parameter slab layout (rows of a (R_TOTAL, 128) f32 array) ----------
VOCAB_PAD = 24                     # one-hot contraction dim padded to a multiple of 8
R_PROJ = 0                         # rows 0:24   embedding @ W_ih + b  (rows >= VOCAB are 0)
R_WHH = R_PROJ + VOCAB_PAD         # rows 24:40  recurrent weights [fwd gates | bwd gates]
R_WTAG = R_WHH + HH                # rows 40:72  hidden2tag (fwd 40:56, bwd 56:72), lanes 0:TAGS
R_BTAG = R_WTAG + 2 * HH           # row  72     hidden2tag bias, lanes 0:TAGS
R_TRANS = 80                       # rows 80:86  transitions.T  [prev, next]
R_TSTOP = 88                       # row  88     transitions[STOP]
R_H0 = 96                          # rows 96:98  initial hidden (fwd, bwd), lanes 0:HH
R_C0 = 104                         # rows 104:106 initial cell
R_TOTAL = 112

# ---- packed output slab layout (per sentence, (RO, 128) f32) --------------------
RO = SEQ + 8                       # rows 0:SEQ = feats (lanes 0:TAGS), rows SEQ:RO = tail
SCORE_LANE = 16                    # tail row, lane holding the Viterbi path score
START_LANE = 17                    # tail row, lane holding the decoded start tag


# ----------------------------------------------------------------------------
# Fused kernel: one-hot gather+projection, BiLSTM, hidden2tag, Viterbi, backtrace.
# ----------------------------------------------------------------------------
def _fused_kernel(sent_ref, prm_ref, out_ref, xf_s, xb_s, hf_s, hb_s, bptr_s):
    S, T = SEQ, TAGS

    # ---- embedding gather fused with input projection: one MXU matmul -----------
    ids = sent_ref[...]                                               # (S, 1) int32
    onehot = (ids == lax.broadcasted_iota(jnp.int32, (S, VOCAB_PAD), 1)
              ).astype(jnp.float32)                                   # (S, VOCAB_PAD)
    xproj = jnp.dot(onehot, prm_ref[R_PROJ:R_PROJ + VOCAB_PAD, :],
                    preferred_element_type=jnp.float32)               # (S, 128)
    xf_s[...] = xproj[:, 0:G4]        # fwd gate pre-activations per timestep
    xb_s[...] = xproj[:, G4:G8]       # bwd gate pre-activations per timestep

    # ---- loop-invariant views / constants ----------------------------------------
    whh_all = prm_ref[R_WHH:R_WHH + HH, :]                            # (16, 128)
    whh_f = whh_all[:, 0:G4]                                          # (16, 64)
    whh_b = whh_all[:, G4:G8]                                         # (16, 64)
    h0 = prm_ref[R_H0:R_H0 + 2, :][:, 0:HH]                           # (2, 16)
    c0 = prm_ref[R_C0:R_C0 + 2, :][:, 0:HH]                           # (2, 16)
    sub2 = lax.broadcasted_iota(jnp.int32, (2, G4), 0)
    lane_g = lax.broadcasted_iota(jnp.int32, (1, G4), 1)
    is_tanh_gate = (lane_g >= 2 * HH) & (lane_g < 3 * HH)             # the 'g' gate
    gmul = jnp.where(is_tanh_gate, 1.0, 0.5).astype(jnp.float32)
    gadd = jnp.where(is_tanh_gate, 0.0, 0.5).astype(jnp.float32)

    # ---- bidirectional LSTM: both directions advance in the same iteration -------
    def lstm_body(j, carry):
        h, c = carry                          # (2, HH): row 0 = fwd, row 1 = bwd
        tb = S - 1 - j
        # input projections for this step (off the recurrence critical path)
        x2 = jnp.where(sub2 == 0, xf_s[pl.ds(j, 1), :], xb_s[pl.ds(tb, 1), :])   # (2, 64)
        # two tiny matmuls -> no post-matmul lane rotate; row 0/1 merged by sublane select
        rec_f = jnp.dot(h, whh_f, preferred_element_type=jnp.float32)  # row 0 valid
        rec_b = jnp.dot(h, whh_b, preferred_element_type=jnp.float32)  # row 1 valid
        pre = x2 + jnp.where(sub2 == 0, rec_f, rec_b)                  # (2, 64)
        # single wide tanh; i/f/o preactivations were pre-scaled by 0.5 at pack time,
        # so sigmoid(z) = 0.5*tanh(z/2)+0.5 comes out of the affine remap below.
        gate = jnp.tanh(pre) * gmul + gadd
        i_g = gate[:, 0:HH]
        f_g = gate[:, HH:2 * HH]
        g_g = gate[:, 2 * HH:3 * HH]
        o_g = gate[:, 3 * HH:4 * HH]
        c_new = f_g * c + i_g * g_g
        h_new = o_g * jnp.tanh(c_new)
        hf_s[pl.ds(j, 1), :] = h_new[0:1, :]
        hb_s[pl.ds(tb, 1), :] = h_new[1:2, :]
        return (h_new, c_new)

    lax.fori_loop(0, S, lstm_body, (h0, c0), unroll=True)

    # ---- hidden2tag, lane-dense (lanes >= TAGS are zero) and stored unmasked -----
    feats128 = (jnp.dot(hf_s[...], prm_ref[R_WTAG:R_WTAG + HH, :],
                        preferred_element_type=jnp.float32)
                + jnp.dot(hb_s[...], prm_ref[R_WTAG + HH:R_WTAG + 2 * HH, :],
                          preferred_element_type=jnp.float32)
                + prm_ref[R_BTAG:R_BTAG + 1, :])                      # (S, 128)
    out_ref[0:S, :] = feats128

    # ---- Viterbi forward recursion (matrix form, f32 throughout) -----------------
    transT = prm_ref[R_TRANS:R_TRANS + T, :][:, 0:T]                  # [prev, next]
    tstop = prm_ref[R_TSTOP:R_TSTOP + 1, :][:, 0:T]                   # transitions[STOP]
    prev_iota = lax.broadcasted_iota(jnp.int32, (T, T), 0).astype(jnp.float32)
    eye = (lax.broadcasted_iota(jnp.int32, (T, T), 0)
           == lax.broadcasted_iota(jnp.int32, (T, T), 1)).astype(jnp.float32)
    lane_t = lax.broadcasted_iota(jnp.int32, (1, T), 1)
    lane_tf = lane_t.astype(jnp.float32)
    fv0 = jnp.where(lane_t == START_IDX, 0.0, -10000.0).astype(jnp.float32)   # (1, T)

    def vit_body(t, fv_row):
        # row -> column "transpose" via eye mask + lane reduce (exact)
        fv_col = jnp.sum(eye * fv_row, axis=1, keepdims=True)                 # (T, 1)
        ntv = fv_col + transT                                                 # (T, T)
        m_row = jnp.max(ntv, axis=0, keepdims=True)                           # (1, T)
        # first-argmax tie break: exact f32 equality on values from the same tensor;
        # indices carried as f32 (< 2^24, exact).  Keep everything f32.
        bp_row = jnp.min(jnp.where(ntv == m_row, prev_iota, float(T)),
                         axis=0, keepdims=True)
        bptr_s[pl.ds(t, 1), :] = bp_row
        return m_row + out_ref[pl.ds(t, 1), :][:, 0:T]

    fv = lax.fori_loop(0, S, vit_body, fv0, unroll=True)

    term = fv + tstop                                                         # (1, T)
    score = jnp.max(term, axis=1, keepdims=True)                              # (1, 1)
    best0 = jnp.min(jnp.where(term == score, lane_tf, float(T)),
                    axis=1, keepdims=True)                                    # (1, 1)

    # ---- in-kernel back-pointer walk (vector one-hot selects, no host sync) ------
    lane128 = lax.broadcasted_iota(jnp.int32, (1, 128), 1)

    def back_body(j, carry):
        best, path_row = carry
        t = S - 1 - j
        path_row = jnp.where(lane128 == t, best, path_row)
        bp_t = bptr_s[pl.ds(t, 1), :]                                         # (1, T)
        best = jnp.sum(jnp.where(lane_tf == best, bp_t, 0.0),
                       axis=1, keepdims=True)                                 # (1, 1)
        return (best, path_row)

    start_f, path_row = lax.fori_loop(
        0, S, back_body, (best0, jnp.zeros((1, 128), jnp.float32)), unroll=True)

    # pack path / score / start tag into one lane-dense tail block (rows S:S+8)
    tail = jnp.where(lane128 == SCORE_LANE, score,
                     jnp.where(lane128 == START_LANE, start_f, path_row))     # (1, 128)
    sub8 = lax.broadcasted_iota(jnp.int32, (8, 128), 0)
    out_ref[S:S + 8, :] = jnp.where(sub8 == 0, tail, 0.0)


# ----------------------------------------------------------------------------
# Parameter packing into a single lane-dense (R_TOTAL, 128) slab.
# ----------------------------------------------------------------------------
def _pack_params(params):
    (emb_table, wih_f, whh_f, b_f, wih_b, whh_b, b_b, h0, c0, wtag, btag, trans) = params

    # sigmoid-fold scaling: i, f, o columns pre-scaled by 0.5 (sigmoid(z)=0.5*tanh(z/2)+0.5)
    gscale = np.ones((G4,), np.float32) * 0.5
    gscale[2 * HH:3 * HH] = 1.0          # 'g' gate stays tanh(z)
    gs = jnp.asarray(gscale)

    def stack_gates(w):  # (4, in, HH) -> (in, 4*HH), gate-major columns (i,f,g,o)
        return jnp.transpose(w, (1, 0, 2)).reshape(w.shape[1], G4)

    wih_cat = jnp.concatenate([stack_gates(wih_f) * gs, stack_gates(wih_b) * gs], axis=1)
    b_cat = jnp.concatenate(
        [jnp.transpose(b_f, (1, 0, 2)).reshape(1, G4) * gs,
         jnp.transpose(b_b, (1, 0, 2)).reshape(1, G4) * gs], axis=1)          # (1, 128)
    # fold embedding lookup + input projection into one table (built in the wrapper)
    proj = jnp.dot(emb_table, wih_cat, precision=lax.Precision.HIGHEST) + b_cat  # (VOCAB,128)
    whh_cat = jnp.concatenate([stack_gates(whh_f) * gs, stack_gates(whh_b) * gs], axis=1)

    slab = jnp.zeros((R_TOTAL, 128), jnp.float32)
    slab = slab.at[R_PROJ:R_PROJ + VOCAB, :].set(proj)
    slab = slab.at[R_WHH:R_WHH + HH, :].set(whh_cat)
    slab = slab.at[R_WTAG:R_WTAG + HH, :TAGS].set(wtag[0:HH, :])
    slab = slab.at[R_WTAG + HH:R_WTAG + 2 * HH, :TAGS].set(wtag[HH:2 * HH, :])
    slab = slab.at[R_BTAG, :TAGS].set(btag[0])
    slab = slab.at[R_TRANS:R_TRANS + TAGS, :TAGS].set(jnp.transpose(trans))
    slab = slab.at[R_TSTOP, :TAGS].set(trans[STOP_IDX])
    slab = slab.at[R_H0:R_H0 + 2, :HH].set(h0)
    slab = slab.at[R_C0:R_C0 + 2, :HH].set(c0)
    return slab


# ----------------------------------------------------------------------------
# Batched pallas_call wrapper.
# ----------------------------------------------------------------------------
@jax.jit
def bilstm_crf_device(sentences, params):
    """sentences: (B, SEQ) int32 word ids. Returns packed (B, RO, 128) output slab."""
    slab = _pack_params(params)
    B = sentences.shape[0]
    sent_col = sentences.reshape(B * SEQ, 1).astype(jnp.int32)
    out = pl.pallas_call(
        _fused_kernel,
        out_shape=jax.ShapeDtypeStruct((B * RO, 128), jnp.float32),
        grid=(B,),
        in_specs=[pl.BlockSpec((SEQ, 1), lambda b: (b, 0)),          # word ids
                  pl.BlockSpec((R_TOTAL, 128), lambda b: (0, 0))],   # param slab (shared)
        out_specs=pl.BlockSpec((RO, 128), lambda b: (b, 0)),
        scratch_shapes=[pltpu.VMEM((SEQ, G4), jnp.float32),    # fwd input projections
                        pltpu.VMEM((SEQ, G4), jnp.float32),    # bwd input projections
                        pltpu.VMEM((SEQ, HH), jnp.float32),    # fwd hidden states
                        pltpu.VMEM((SEQ, HH), jnp.float32),    # bwd hidden states
                        pltpu.VMEM((SEQ, TAGS), jnp.float32)], # Viterbi backpointers
        compiler_params=pltpu.CompilerParams(
            dimension_semantics=("parallel",)),
    )(sent_col, slab)
    return out.reshape(B, RO, 128)


def bilstm_crf_forward(sentences, params):
    """Runs the fused kernel. Returns list of (path_score, best_path, feats) per sentence."""
    out = np.asarray(jax.block_until_ready(bilstm_crf_device(sentences, params)))
    results = []
    for b in range(out.shape[0]):
        feats = out[b, :SEQ, :TAGS]
        tail = out[b, SEQ]
        best_path = [int(round(float(v))) for v in tail[:SEQ]]
        path_score = float(tail[SCORE_LANE])
        start = int(round(float(tail[START_LANE])))
        assert start == START_IDX
        results.append((path_score, best_path, feats))
    return results


# ----------------------------------------------------------------------------
# NumPy reference (exactly mirrors the PyTorch module semantics).
# ----------------------------------------------------------------------------
def _sig(x):
    return 1.0 / (1.0 + np.exp(-x))


def reference_forward(sentence, params):
    (emb_table, wih_f, whh_f, b_f, wih_b, whh_b, b_b, h0, c0, wtag, btag, trans) = [
        np.asarray(p, np.float32) for p in params]
    sent = np.asarray(sentence)
    emb = emb_table[sent]
    S = emb.shape[0]

    def run(order, wih, whh, b, h, c):
        outs = np.zeros((S, HH), np.float32)
        for t in order:
            x = emb[t]
            gs = [x @ wih[g] + h @ whh[g] + b[g, 0] for g in range(4)]
            i, f = _sig(gs[0]), _sig(gs[1])
            gg, o = np.tanh(gs[2]), _sig(gs[3])
            c = f * c + i * gg
            h = o * np.tanh(c)
            outs[t] = h
        return outs

    out_f = run(range(S), wih_f, whh_f, b_f, h0[0], c0[0])
    out_b = run(range(S - 1, -1, -1), wih_b, whh_b, b_b, h0[1], c0[1])
    feats = np.concatenate([out_f, out_b], axis=1) @ wtag + btag[0]

    fv = np.full((TAGS,), -10000.0, np.float32)
    fv[START_IDX] = 0.0
    bptrs = []
    for t in range(S):
        ntv = fv[None, :] + trans                        # [next, prev]
        bptrs.append(ntv.argmax(axis=1))
        fv = ntv.max(axis=1) + feats[t]
    term = fv + trans[STOP_IDX]
    best = int(term.argmax())
    score = float(term[best])
    path = [best]
    for bp in reversed(bptrs):
        best = int(bp[best])
        path.append(best)
    assert path.pop() == START_IDX
    path.reverse()
    return feats, score, path


if __name__ == "__main__":
    key = jax.random.PRNGKey(0)
    ks = jax.random.split(key, 12)
    emb_table = jax.random.normal(ks[0], (VOCAB, EMBED), jnp.float32)
    wih_f = jax.random.normal(ks[1], (4, EMBED, HH), jnp.float32) * 0.25
    whh_f = jax.random.normal(ks[2], (4, HH, HH), jnp.float32) * 0.25
    b_f = jax.random.normal(ks[3], (4, 1, HH), jnp.float32) * 0.25
    wih_b = jax.random.normal(ks[4], (4, EMBED, HH), jnp.float32) * 0.25
    whh_b = jax.random.normal(ks[5], (4, HH, HH), jnp.float32) * 0.25
    b_b = jax.random.normal(ks[6], (4, 1, HH), jnp.float32) * 0.25
    h0 = jax.random.normal(ks[7], (2, HH), jnp.float32)      # (dirs, HH) initial hidden
    c0 = jax.random.normal(ks[8], (2, HH), jnp.float32)
    wtag = jax.random.normal(ks[9], (HIDDEN, TAGS), jnp.float32) * 0.25
    btag = jax.random.normal(ks[10], (1, TAGS), jnp.float32) * 0.25
    transitions = jax.random.normal(ks[11], (TAGS, TAGS), jnp.float32)
    transitions = transitions.at[START_IDX, :].set(-10000.0)
    transitions = transitions.at[:, STOP_IDX].set(-10000.0)

    params = (emb_table, wih_f, whh_f, b_f, wih_b, whh_b, b_b, h0, c0, wtag, btag, transitions)

    BATCH = 2
    sentences = jax.random.randint(jax.random.PRNGKey(42), (BATCH, SEQ), 0, VOCAB)

    results = bilstm_crf_forward(sentences, params)
    for b in range(BATCH):
        ref_feats, ref_score, ref_path = reference_forward(np.asarray(sentences[b]), params)
        score, path, feats = results[b]
        np.testing.assert_allclose(feats, ref_feats, rtol=2e-3, atol=1e-2)
        assert path == ref_path, (b, path, ref_path)
        assert abs(score - ref_score) < 5e-2, (b, score, ref_score)

    print("KERNEL_OK")
</pallas_src>

<mosaic_0001>
module attributes {stable_mosaic.version = 11 : i64} {
  func.func @_fused_kernel(%arg0: i32, %arg1: memref<8x1xi32, #tpu.memory_space<vmem>>, %arg2: memref<112x128xf32, #tpu.memory_space<vmem>>, %arg3: memref<16x128xf32, #tpu.memory_space<vmem>>, %arg4: memref<8x64xf32, #tpu.memory_space<vmem>>, %arg5: memref<8x64xf32, #tpu.memory_space<vmem>>, %arg6: memref<8x16xf32, #tpu.memory_space<vmem>>, %arg7: memref<8x16xf32, #tpu.memory_space<vmem>>, %arg8: memref<8x6xf32, #tpu.memory_space<vmem>>) attributes {dimension_semantics = [#tpu.dimension_semantics<parallel>], iteration_bounds = array<i64: 2>, scalar_prefetch = 0 : i64, scratch_operands = 5 : i64, tpu.core_type = #tpu.core_type<tc>, window_params = [{transform_indices = @transform_0, window_bounds = array<i64: 8, 1>}, {pipeline_mode = #tpu.pipeline_mode<synchronous>, transform_indices = @transform_1, window_bounds = array<i64: 112, 128>}, {transform_indices = @transform_2, window_bounds = array<i64: 16, 128>}]} {
    %c0 = arith.constant 0 : index
    %c0_0 = arith.constant 0 : index
    %0 = vector.load %arg1[%c0, %c0_0] : memref<8x1xi32, #tpu.memory_space<vmem>>, vector<8x1xi32>
    %1 = tpu.iota {dimensions = array<i32: 1>} : vector<8x24xi32>
    %2 = vector.broadcast %0 : vector<8x1xi32> to vector<8x24xi32>
    %3 = arith.cmpi eq, %2, %1 : vector<8x24xi32>
    %4 = arith.extui %3 : vector<8x24xi1> to vector<8x24xi32>
    %5 = arith.sitofp %4 : vector<8x24xi32> to vector<8x24xf32>
    %c0_1 = arith.constant 0 : index
    %c0_2 = arith.constant 0 : index
    %6 = vector.load %arg2[%c0_1, %c0_2] : memref<112x128xf32, #tpu.memory_space<vmem>>, vector<24x128xf32>
    %cst = arith.constant dense<0.000000e+00> : vector<8x128xf32>
    %7 = tpu.matmul %5, %6, %cst {dimension_numbers = #tpu.dot_dimension_numbers<[1], [0], [0], [1], [0, 0, 1, 1], [], []>} : vector<8x24xf32>, vector<24x128xf32>, vector<8x128xf32> -> vector<8x128xf32>
    %8 = vector.extract_strided_slice %7 {offsets = [0, 0], sizes = [8, 64], strides = [1, 1]} : vector<8x128xf32> to vector<8x64xf32>
    %c0_3 = arith.constant 0 : index
    %c0_4 = arith.constant 0 : index
    %9 = vector.load %arg4[%c0_3, %c0_4] : memref<8x64xf32, #tpu.memory_space<vmem>>, vector<8x64xf32>
    tpu.vector_store %arg4[%c0_3, %c0_4], %8 {strides = array<i32>} : memref<8x64xf32, #tpu.memory_space<vmem>>, vector<8x64xf32>,
    %10 = vector.extract_strided_slice %7 {offsets = [0, 64], sizes = [8, 64], strides = [1, 1]} : vector<8x128xf32> to vector<8x64xf32>
    %c0_5 = arith.constant 0 : index
    %c0_6 = arith.constant 0 : index
    %11 = vector.load %arg5[%c0_5, %c0_6] : memref<8x64xf32, #tpu.memory_space<vmem>>, vector<8x64xf32>
    tpu.vector_store %arg5[%c0_5, %c0_6], %10 {strides = array<i32>} : memref<8x64xf32, #tpu.memory_space<vmem>>, vector<8x64xf32>,
    %c24 = arith.constant 24 : index
    %c0_7 = arith.constant 0 : index
    %12 = vector.load %arg2[%c24, %c0_7] : memref<112x128xf32, #tpu.memory_space<vmem>>, vector<16x128xf32>
    %13 = vector.extract_strided_slice %12 {offsets = [0, 0], sizes = [16, 64], strides = [1, 1]} : vector<16x128xf32> to vector<16x64xf32>
    %14 = vector.extract_strided_slice %12 {offsets = [0, 64], sizes = [16, 64], strides = [1, 1]} : vector<16x128xf32> to vector<16x64xf32>
    %c96 = arith.constant 96 : index
    %c0_8 = arith.constant 0 : index
    %15 = vector.load %arg2[%c96, %c0_8] : memref<112x128xf32, #tpu.memory_space<vmem>>, vector<2x128xf32>
    %16 = vector.extract_strided_slice %15 {offsets = [0, 0], sizes = [2, 16], strides = [1, 1]} : vector<2x128xf32> to vector<2x16xf32>
    %c104 = arith.constant 104 : index
    %c0_9 = arith.constant 0 : index
    %17 = vector.load %arg2[%c104, %c0_9] : memref<112x128xf32, #tpu.memory_space<vmem>>, vector<2x128xf32>
    %18 = vector.extract_strided_slice %17 {offsets = [0, 0], sizes = [2, 16], strides = [1, 1]} : vector<2x128xf32> to vector<2x16xf32>
    %19 = tpu.iota {dimensions = array<i32: 0>} : vector<2x64xi32>
    %20 = tpu.iota {dimensions = array<i32: 1>} : vector<1x64xi32>
    %c32_i32 = arith.constant 32 : i32
    %21 = vector.broadcast %c32_i32 : i32 to vector<1x64xi32>
    %22 = arith.cmpi sge, %20, %21 : vector<1x64xi32>
    %c48_i32 = arith.constant 48 : i32
    %23 = vector.broadcast %c48_i32 : i32 to vector<1x64xi32>
    %24 = arith.cmpi slt, %20, %23 : vector<1x64xi32>
    %25 = arith.andi %22, %24 : vector<1x64xi1>
    %cst_10 = arith.constant 1.000000e+00 : f32
    %cst_11 = arith.constant 5.000000e-01 : f32
    %26 = vector.broadcast %cst_10 : f32 to vector<1x64xf32>
    %27 = vector.broadcast %cst_11 : f32 to vector<1x64xf32>
    %28 = arith.select %25, %26, %27 : vector<1x64xi1>, vector<1x64xf32>
    %cst_12 = arith.constant 0.000000e+00 : f32
    %cst_13 = arith.constant 5.000000e-01 : f32
    %29 = vector.broadcast %cst_12 : f32 to vector<1x64xf32>
    %30 = vector.broadcast %cst_13 : f32 to vector<1x64xf32>
    %31 = arith.select %25, %29, %30 : vector<1x64xi1>, vector<1x64xf32>
    %c0_i32 = arith.constant 0 : i32
    %c7_i32 = arith.constant 7 : i32
    %32 = arith.subi %c7_i32, %c0_i32 : i32
    %c0_i32_14 = arith.constant 0 : i32
    %33 = vector.broadcast %c0_i32_14 : i32 to vector<2x64xi32>
    %34 = arith.cmpi eq, %19, %33 : vector<2x64xi32>
    %35 = arith.index_cast %c0_i32 : i32 to index
    %c0_15 = arith.constant 0 : index
    %36 = vector.load %arg4[%35, %c0_15] : memref<8x64xf32, #tpu.memory_space<vmem>>, vector<1x64xf32>
    %37 = arith.index_cast %32 : i32 to index
    %c0_16 = arith.constant 0 : index
    %38 = vector.load %arg5[%37, %c0_16] : memref<8x64xf32, #tpu.memory_space<vmem>>, vector<1x64xf32>
    %39 = vector.shape_cast %36 : vector<1x64xf32> to vector<1x64xf32>
    %40 = vector.broadcast %39 : vector<1x64xf32> to vector<2x64xf32>
    %41 = vector.shape_cast %38 : vector<1x64xf32> to vector<1x64xf32>
    %42 = vector.broadcast %41 : vector<1x64xf32> to vector<2x64xf32>
    %43 = arith.select %34, %40, %42 : vector<2x64xi1>, vector<2x64xf32>
    %cst_17 = arith.constant dense<0.000000e+00> : vector<2x64xf32>
    %44 = tpu.matmul %16, %13, %cst_17 {dimension_numbers = #tpu.dot_dimension_numbers<[1], [0], [0], [1], [0, 0, 1, 1], [], []>} : vector<2x16xf32>, vector<16x64xf32>, vector<2x64xf32> -> vector<2x64xf32>
    %cst_18 = arith.constant dense<0.000000e+00> : vector<2x64xf32>
    %45 = tpu.matmul %16, %14, %cst_18 {dimension_numbers = #tpu.dot_dimension_numbers<[1], [0], [0], [1], [0, 0, 1, 1], [], []>} : vector<2x16xf32>, vector<16x64xf32>, vector<2x64xf32> -> vector<2x64xf32>
    %c0_i32_19 = arith.constant 0 : i32
    %46 = vector.broadcast %c0_i32_19 : i32 to vector<2x64xi32>
    %47 = arith.cmpi eq, %19, %46 : vector<2x64xi32>
    %48 = arith.select %47, %44, %45 : vector<2x64xi1>, vector<2x64xf32>
    %49 = arith.addf %43, %48 : vector<2x64xf32>
    %50 = math.tanh %49 : vector<2x64xf32>
    %51 = vector.broadcast %28 : vector<1x64xf32> to vector<2x64xf32>
    %52 = arith.mulf %50, %51 : vector<2x64xf32>
    %53 = vector.broadcast %31 : vector<1x64xf32> to vector<2x64xf32>
    %54 = arith.addf %52, %53 : vector<2x64xf32>
    %55 = vector.extract_strided_slice %54 {offsets = [0, 0], sizes = [2, 16], strides = [1, 1]} : vector<2x64xf32> to vector<2x16xf32>
    %56 = vector.extract_strided_slice %54 {offsets = [0, 16], sizes = [2, 16], strides = [1, 1]} : vector<2x64xf32> to vector<2x16xf32>
    %57 = vector.extract_strided_slice %54 {offsets = [0, 32], sizes = [2, 16], strides = [1, 1]} : vector<2x64xf32> to vector<2x16xf32>
    %58 = vector.extract_strided_slice %54 {offsets = [0, 48], sizes = [2, 16], strides = [1, 1]} : vector<2x64xf32> to vector<2x16xf32>
    %59 = arith.mulf %56, %18 : vector<2x16xf32>
    %60 = arith.mulf %55, %57 : vector<2x16xf32>
    %61 = arith.addf %59, %60 : vector<2x16xf32>
    %62 = math.tanh %61 : vector<2x16xf32>
    %63 = arith.mulf %58, %62 : vector<2x16xf32>
    %64 = vector.extract_strided_slice %63 {offsets = [0, 0], sizes = [1, 16], strides = [1, 1]} : vector<2x16xf32> to vector<1x16xf32>
    %65 = arith.index_cast %c0_i32 : i32 to index
    %c0_20 = arith.constant 0 : index
    %66 = vector.load %arg6[%65, %c0_20] : memref<8x16xf32, #tpu.memory_space<vmem>>, vector<1x16xf32>
    tpu.vector_store %arg6[%65, %c0_20], %64 {strides = array<i32>} : memref<8x16xf32, #tpu.memory_space<vmem>>, vector<1x16xf32>,
    %67 = vector.extract_strided_slice %63 {offsets = [1, 0], sizes = [1, 16], strides = [1, 1]} : vector<2x16xf32> to vector<1x16xf32>
    %68 = arith.index_cast %32 : i32 to index
    %c0_21 = arith.constant 0 : index
    %69 = vector.load %arg7[%68, %c0_21] : memref<8x16xf32, #tpu.memory_space<vmem>>, vector<1x16xf32>
    tpu.vector_store %arg7[%68, %c0_21], %67 {strides = array<i32>} : memref<8x16xf32, #tpu.memory_space<vmem>>, vector<1x16xf32>,
    %c1_i32 = arith.constant 1 : i32
    %c7_i32_22 = arith.constant 7 : i32
    %70 = arith.subi %c7_i32_22, %c1_i32 : i32
    %c0_i32_23 = arith.constant 0 : i32
    %71 = vector.broadcast %c0_i32_23 : i32 to vector<2x64xi32>
    %72 = arith.cmpi eq, %19, %71 : vector<2x64xi32>
    %73 = arith.index_cast %c1_i32 : i32 to index
    %c0_24 = arith.constant 0 : index
    %74 = vector.load %arg4[%73, %c0_24] : memref<8x64xf32, #tpu.memory_space<vmem>>, vector<1x64xf32>
    %75 = arith.index_cast %70 : i32 to index
    %c0_25 = arith.constant 0 : index
    %76 = vector.load %arg5[%75, %c0_25] : memref<8x64xf32, #tpu.memory_space<vmem>>, vector<1x64xf32>
    %77 = vector.shape_cast %74 : vector<1x64xf32> to vector<1x64xf32>
    %78 = vector.broadcast %77 : vector<1x64xf32> to vector<2x64xf32>
    %79 = vector.shape_cast %76 : vector<1x64xf32> to vector<1x64xf32>
    %80 = vector.broadcast %79 : vector<1x64xf32> to vector<2x64xf32>
    %81 = arith.select %72, %78, %80 : vector<2x64xi1>, vector<2x64xf32>
    %cst_26 = arith.constant dense<0.000000e+00> : vector<2x64xf32>
    %82 = tpu.matmul %63, %13, %cst_26 {dimension_numbers = #tpu.dot_dimension_numbers<[1], [0], [0], [1], [0, 0, 1, 1], [], []>} : vector<2x16xf32>, vector<16x64xf32>, vector<2x64xf32> -> vector<2x64xf32>
    %cst_27 = arith.constant dense<0.000000e+00> : vector<2x64xf32>
    %83 = tpu.matmul %63, %14, %cst_27 {dimension_numbers = #tpu.dot_dimension_numbers<[1], [0], [0], [1], [0, 0, 1, 1], [], []>} : vector<2x16xf32>, vector<16x64xf32>, vector<2x64xf32> -> vector<2x64xf32>
    %c0_i32_28 = arith.constant 0 : i32
    %84 = vector.broadcast %c0_i32_28 : i32 to vector<2x64xi32>
    %85 = arith.cmpi eq, %19, %84 : vector<2x64xi32>
    %86 = arith.select %85, %82, %83 : vector<2x64xi1>, vector<2x64xf32>
    %87 = arith.addf %81, %86 : vector<2x64xf32>
    %88 = math.tanh %87 : vector<2x64xf32>
    %89 = vector.broadcast %28 : vector<1x64xf32> to vector<2x64xf32>
    %90 = arith.mulf %88, %89 : vector<2x64xf32>
    %91 = vector.broadcast %31 : vector<1x64xf32> to vector<2x64xf32>
    %92 = arith.addf %90, %91 : vector<2x64xf32>
    %93 = vector.extract_strided_slice %92 {offsets = [0, 0], sizes = [2, 16], strides = [1, 1]} : vector<2x64xf32> to vector<2x16xf32>
    %94 = vector.extract_strided_slice %92 {offsets = [0, 16], sizes = [2, 16], strides = [1, 1]} : vector<2x64xf32> to vector<2x16xf32>
    %95 = vector.extract_strided_slice %92 {offsets = [0, 32], sizes = [2, 16], strides = [1, 1]} : vector<2x64xf32> to vector<2x16xf32>
    %96 = vector.extract_strided_slice %92 {offsets = [0, 48], sizes = [2, 16], strides = [1, 1]} : vector<2x64xf32> to vector<2x16xf32>
    %97 = arith.mulf %94, %61 : vector<2x16xf32>
    %98 = arith.mulf %93, %95 : vector<2x16xf32>
    %99 = arith.addf %97, %98 : vector<2x16xf32>
    %100 = math.tanh %99 : vector<2x16xf32>
    %101 = arith.mulf %96, %100 : vector<2x16xf32>
    %102 = vector.extract_strided_slice %101 {offsets = [0, 0], sizes = [1, 16], strides = [1, 1]} : vector<2x16xf32> to vector<1x16xf32>
    %103 = arith.index_cast %c1_i32 : i32 to index
    %c0_29 = arith.constant 0 : index
    %104 = vector.load %arg6[%103, %c0_29] : memref<8x16xf32, #tpu.memory_space<vmem>>, vector<1x16xf32>
    tpu.vector_store %arg6[%103, %c0_29], %102 {strides = array<i32>} : memref<8x16xf32, #tpu.memory_space<vmem>>, vector<1x16xf32>,
    %105 = vector.extract_strided_slice %101 {offsets = [1, 0], sizes = [1, 16], strides = [1, 1]} : vector<2x16xf32> to vector<1x16xf32>
    %106 = arith.index_cast %70 : i32 to index
    %c0_30 = arith.constant 0 : index
    %107 = vector.load %arg7[%106, %c0_30] : memref<8x16xf32, #tpu.memory_space<vmem>>, vector<1x16xf32>
    tpu.vector_store %arg7[%106, %c0_30], %105 {strides = array<i32>} : memref<8x16xf32, #tpu.memory_space<vmem>>, vector<1x16xf32>,
    %c2_i32 = arith.constant 2 : i32
    %c7_i32_31 = arith.constant 7 : i32
    %108 = arith.subi %c7_i32_31, %c2_i32 : i32
    %c0_i32_32 = arith.constant 0 : i32
    %109 = vector.broadcast %c0_i32_32 : i32 to vector<2x64xi32>
    %110 = arith.cmpi eq, %19, %109 : vector<2x64xi32>
    %111 = arith.index_cast %c2_i32 : i32 to index
    %c0_33 = arith.constant 0 : index
    %112 = vector.load %arg4[%111, %c0_33] : memref<8x64xf32, #tpu.memory_space<vmem>>, vector<1x64xf32>
    %113 = arith.index_cast %108 : i32 to index
    %c0_34 = arith.constant 0 : index
    %114 = vector.load %arg5[%113, %c0_34] : memref<8x64xf32, #tpu.memory_space<vmem>>, vector<1x64xf32>
    %115 = vector.shape_cast %112 : vector<1x64xf32> to vector<1x64xf32>
    %116 = vector.broadcast %115 : vector<1x64xf32> to vector<2x64xf32>
    %117 = vector.shape_cast %114 : vector<1x64xf32> to vector<1x64xf32>
    %118 = vector.broadcast %117 : vector<1x64xf32> to vector<2x64xf32>
    %119 = arith.select %110, %116, %118 : vector<2x64xi1>, vector<2x64xf32>
    %cst_35 = arith.constant dense<0.000000e+00> : vector<2x64xf32>
    %120 = tpu.matmul %101, %13, %cst_35 {dimension_numbers = #tpu.dot_dimension_numbers<[1], [0], [0], [1], [0, 0, 1, 1], [], []>} : vector<2x16xf32>, vector<16x64xf32>, vector<2x64xf32> -> vector<2x64xf32>
    %cst_36 = arith.constant dense<0.000000e+00> : vector<2x64xf32>
    %121 = tpu.matmul %101, %14, %cst_36 {dimension_numbers = #tpu.dot_dimension_numbers<[1], [0], [0], [1], [0, 0, 1, 1], [], []>} : vector<2x16xf32>, vector<16x64xf32>, vector<2x64xf32> -> vector<2x64xf32>
    %c0_i32_37 = arith.constant 0 : i32
    %122 = vector.broadcast %c0_i32_37 : i32 to vector<2x64xi32>
    %123 = arith.cmpi eq, %19, %122 : vector<2x64xi32>
    %124 = arith.select %123, %120, %121 : vector<2x64xi1>, vector<2x64xf32>
    %125 = arith.addf %119, %124 : vector<2x64xf32>
    %126 = math.tanh %125 : vector<2x64xf32>
    %127 = vector.broadcast %28 : vector<1x64xf32> to vector<2x64xf32>
    %128 = arith.mulf %126, %127 : vector<2x64xf32>
    %129 = vector.broadcast %31 : vector<1x64xf32> to vector<2x64xf32>
    %130 = arith.addf %128, %129 : vector<2x64xf32>
    %131 = vector.extract_strided_slice %130 {offsets = [0, 0], sizes = [2, 16], strides = [1, 1]} : vector<2x64xf32> to vector<2x16xf32>
    %132 = vector.extract_strided_slice %130 {offsets = [0, 16], sizes = [2, 16], strides = [1, 1]} : vector<2x64xf32> to vector<2x16xf32>
    %133 = vector.extract_strided_slice %130 {offsets = [0, 32], sizes = [2, 16], strides = [1, 1]} : vector<2x64xf32> to vector<2x16xf32>
    %134 = vector.extract_strided_slice %130 {offsets = [0, 48], sizes = [2, 16], strides = [1, 1]} : vector<2x64xf32> to vector<2x16xf32>
    %135 = arith.mulf %132, %99 : vector<2x16xf32>
    %136 = arith.mulf %131, %133 : vector<2x16xf32>
    %137 = arith.addf %135, %136 : vector<2x16xf32>
    %138 = math.tanh %137 : vector<2x16xf32>
    %139 = arith.mulf %134, %138 : vector<2x16xf32>
    %140 = vector.extract_strided_slice %139 {offsets = [0, 0], sizes = [1, 16], strides = [1, 1]} : vector<2x16xf32> to vector<1x16xf32>
    %141 = arith.index_cast %c2_i32 : i32 to index
    %c0_38 = arith.constant 0 : index
    %142 = vector.load %arg6[%141, %c0_38] : memref<8x16xf32, #tpu.memory_space<vmem>>, vector<1x16xf32>
    tpu.vector_store %arg6[%141, %c0_38], %140 {strides = array<i32>} : memref<8x16xf32, #tpu.memory_space<vmem>>, vector<1x16xf32>,
    %143 = vector.extract_strided_slice %139 {offsets = [1, 0], sizes = [1, 16], strides = [1, 1]} : vector<2x16xf32> to vector<1x16xf32>
    %144 = arith.index_cast %108 : i32 to index
    %c0_39 = arith.constant 0 : index
    %145 = vector.load %arg7[%144, %c0_39] : memref<8x16xf32, #tpu.memory_space<vmem>>, vector<1x16xf32>
    tpu.vector_store %arg7[%144, %c0_39], %143 {strides = array<i32>} : memref<8x16xf32, #tpu.memory_space<vmem>>, vector<1x16xf32>,
    %c3_i32 = arith.constant 3 : i32
    %c7_i32_40 = arith.constant 7 : i32
    %146 = arith.subi %c7_i32_40, %c3_i32 : i32
    %c0_i32_41 = arith.constant 0 : i32
    %147 = vector.broadcast %c0_i32_41 : i32 to vector<2x64xi32>
    %148 = arith.cmpi eq, %19, %147 : vector<2x64xi32>
    %149 = arith.index_cast %c3_i32 : i32 to index
    %c0_42 = arith.constant 0 : index
    %150 = vector.load %arg4[%149, %c0_42] : memref<8x64xf32, #tpu.memory_space<vmem>>, vector<1x64xf32>
    %151 = arith.index_cast %146 : i32 to index
    %c0_43 = arith.constant 0 : index
    %152 = vector.load %arg5[%151, %c0_43] : memref<8x64xf32, #tpu.memory_space<vmem>>, vector<1x64xf32>
    %153 = vector.shape_cast %150 : vector<1x64xf32> to vector<1x64xf32>
    %154 = vector.broadcast %153 : vector<1x64xf32> to vector<2x64xf32>
    %155 = vector.shape_cast %152 : vector<1x64xf32> to vector<1x64xf32>
    %156 = vector.broadcast %155 : vector<1x64xf32> to vector<2x64xf32>
    %157 = arith.select %148, %154, %156 : vector<2x64xi1>, vector<2x64xf32>
    %cst_44 = arith.constant dense<0.000000e+00> : vector<2x64xf32>
    %158 = tpu.matmul %139, %13, %cst_44 {dimension_numbers = #tpu.dot_dimension_numbers<[1], [0], [0], [1], [0, 0, 1, 1], [], []>} : vector<2x16xf32>, vector<16x64xf32>, vector<2x64xf32> -> vector<2x64xf32>
    %cst_45 = arith.constant dense<0.000000e+00> : vector<2x64xf32>
    %159 = tpu.matmul %139, %14, %cst_45 {dimension_numbers = #tpu.dot_dimension_numbers<[1], [0], [0], [1], [0, 0, 1, 1], [], []>} : vector<2x16xf32>, vector<16x64xf32>, vector<2x64xf32> -> vector<2x64xf32>
    %c0_i32_46 = arith.constant 0 : i32
    %160 = vector.broadcast %c0_i32_46 : i32 to vector<2x64xi32>
    %161 = arith.cmpi eq, %19, %160 : vector<2x64xi32>
    %162 = arith.select %161, %158, %159 : vector<2x64xi1>, vector<2x64xf32>
    %163 = arith.addf %157, %162 : vector<2x64xf32>
    %164 = math.tanh %163 : vector<2x64xf32>
    %165 = vector.broadcast %28 : vector<1x64xf32> to vector<2x64xf32>
    %166 = arith.mulf %164, %165 : vector<2x64xf32>
    %167 = vector.broadcast %31 : vector<1x64xf32> to vector<2x64xf32>
    %168 = arith.addf %166, %167 : vector<2x64xf32>
    %169 = vector.extract_strided_slice %168 {offsets = [0, 0], sizes = [2, 16], strides = [1, 1]} : vector<2x64xf32> to vector<2x16xf32>
    %170 = vector.extract_strided_slice %168 {offsets = [0, 16], sizes = [2, 16], strides = [1, 1]} : vector<2x64xf32> to vector<2x16xf32>
    %171 = vector.extract_strided_slice %168 {offsets = [0, 32], sizes = [2, 16], strides = [1, 1]} : vector<2x64xf32> to vector<2x16xf32>
    %172 = vector.extract_strided_slice %168 {offsets = [0, 48], sizes = [2, 16], strides = [1, 1]} : vector<2x64xf32> to vector<2x16xf32>
    %173 = arith.mulf %170, %137 : vector<2x16xf32>
    %174 = arith.mulf %169, %171 : vector<2x16xf32>
    %175 = arith.addf %173, %174 : vector<2x16xf32>
    %176 = math.tanh %175 : vector<2x16xf32>
    %177 = arith.mulf %172, %176 : vector<2x16xf32>
    %178 = vector.extract_strided_slice %177 {offsets = [0, 0], sizes = [1, 16], strides = [1, 1]} : vector<2x16xf32> to vector<1x16xf32>
    %179 = arith.index_cast %c3_i32 : i32 to index
    %c0_47 = arith.constant 0 : index
    %180 = vector.load %arg6[%179, %c0_47] : memref<8x16xf32, #tpu.memory_space<vmem>>, vector<1x16xf32>
    tpu.vector_store %arg6[%179, %c0_47], %178 {strides = array<i32>} : memref<8x16xf32, #tpu.memory_space<vmem>>, vector<1x16xf32>,
    %181 = vector.extract_strided_slice %177 {offsets = [1, 0], sizes = [1, 16], strides = [1, 1]} : vector<2x16xf32> to vector<1x16xf32>
    %182 = arith.index_cast %146 : i32 to index
    %c0_48 = arith.constant 0 : index
    %183 = vector.load %arg7[%182, %c0_48] : memref<8x16xf32, #tpu.memory_space<vmem>>, vector<1x16xf32>
    tpu.vector_store %arg7[%182, %c0_48], %181 {strides = array<i32>} : memref<8x16xf32, #tpu.memory_space<vmem>>, vector<1x16xf32>,
    %c4_i32 = arith.constant 4 : i32
    %c7_i32_49 = arith.constant 7 : i32
    %184 = arith.subi %c7_i32_49, %c4_i32 : i32
    %c0_i32_50 = arith.constant 0 : i32
    %185 = vector.broadcast %c0_i32_50 : i32 to vector<2x64xi32>
    %186 = arith.cmpi eq, %19, %185 : vector<2x64xi32>
    %187 = arith.index_cast %c4_i32 : i32 to index
    %c0_51 = arith.constant 0 : index
    %188 = vector.load %arg4[%187, %c0_51] : memref<8x64xf32, #tpu.memory_space<vmem>>, vector<1x64xf32>
    %189 = arith.index_cast %184 : i32 to index
    %c0_52 = arith.constant 0 : index
    %190 = vector.load %arg5[%189, %c0_52] : memref<8x64xf32, #tpu.memory_space<vmem>>, vector<1x64xf32>
    %191 = vector.shape_cast %188 : vector<1x64xf32> to vector<1x64xf32>
    %192 = vector.broadcast %191 : vector<1x64xf32> to vector<2x64xf32>
    %193 = vector.shape_cast %190 : vector<1x64xf32> to vector<1x64xf32>
    %194 = vector.broadcast %193 : vector<1x64xf32> to vector<2x64xf32>
    %195 = arith.select %186, %192, %194 : vector<2x64xi1>, vector<2x64xf32>
    %cst_53 = arith.constant dense<0.000000e+00> : vector<2x64xf32>
    %196 = tpu.matmul %177, %13, %cst_53 {dimension_numbers = #tpu.dot_dimension_numbers<[1], [0], [0], [1], [0, 0, 1, 1], [], []>} : vector<2x16xf32>, vector<16x64xf32>, vector<2x64xf32> -> vector<2x64xf32>
    %cst_54 = arith.constant dense<0.000000e+00> : vector<2x64xf32>
    %197 = tpu.matmul %177, %14, %cst_54 {dimension_numbers = #tpu.dot_dimension_numbers<[1], [0], [0], [1], [0, 0, 1, 1], [], []>} : vector<2x16xf32>, vector<16x64xf32>, vector<2x64xf32> -> vector<2x64xf32>
    %c0_i32_55 = arith.constant 0 : i32
    %198 = vector.broadcast %c0_i32_55 : i32 to vector<2x64xi32>
    %199 = arith.cmpi eq, %19, %198 : vector<2x64xi32>
    %200 = arith.select %199, %196, %197 : vector<2x64xi1>, vector<2x64xf32>
    %201 = arith.addf %195, %200 : vector<2x64xf32>
    %202 = math.tanh %201 : vector<2x64xf32>
    %203 = vector.broadcast %28 : vector<1x64xf32> to vector<2x64xf32>
    %204 = arith.mulf %202, %203 : vector<2x64xf32>
    %205 = vector.broadcast %31 : vector<1x64xf32> to vector<2x64xf32>
    %206 = arith.addf %204, %205 : vector<2x64xf32>
    %207 = vector.extract_strided_slice %206 {offsets = [0, 0], sizes = [2, 16], strides = [1, 1]} : vector<2x64xf32> to vector<2x16xf32>
    %208 = vector.extract_strided_slice %206 {offsets = [0, 16], sizes = [2, 16], strides = [1, 1]} : vector<2x64xf32> to vector<2x16xf32>
    %209 = vector.extract_strided_slice %206 {offsets = [0, 32], sizes = [2, 16], strides = [1, 1]} : vector<2x64xf32> to vector<2x16xf32>
    %210 = vector.extract_strided_slice %206 {offsets = [0, 48], sizes = [2, 16], strides = [1, 1]} : vector<2x64xf32> to vector<2x16xf32>
    %211 = arith.mulf %208, %175 : vector<2x16xf32>
    %212 = arith.mulf %207, %209 : vector<2x16xf32>
    %213 = arith.addf %211, %212 : vector<2x16xf32>
    %214 = math.tanh %213 : vector<2x16xf32>
    %215 = arith.mulf %210, %214 : vector<2x16xf32>
    %216 = vector.extract_strided_slice %215 {offsets = [0, 0], sizes = [1, 16], strides = [1, 1]} : vector<2x16xf32> to vector<1x16xf32>
    %217 = arith.index_cast %c4_i32 : i32 to index
    %c0_56 = arith.constant 0 : index
    %218 = vector.load %arg6[%217, %c0_56] : memref<8x16xf32, #tpu.memory_space<vmem>>, vector<1x16xf32>
    tpu.vector_store %arg6[%217, %c0_56], %216 {strides = array<i32>} : memref<8x16xf32, #tpu.memory_space<vmem>>, vector<1x16xf32>,
    %219 = vector.extract_strided_slice %215 {offsets = [1, 0], sizes = [1, 16], strides = [1, 1]} : vector<2x16xf32> to vector<1x16xf32>
    %220 = arith.index_cast %184 : i32 to index
    %c0_57 = arith.constant 0 : index
    %221 = vector.load %arg7[%220, %c0_57] : memref<8x16xf32, #tpu.memory_space<vmem>>, vector<1x16xf32>
    tpu.vector_store %arg7[%220, %c0_57], %219 {strides = array<i32>} : memref<8x16xf32, #tpu.memory_space<vmem>>, vector<1x16xf32>,
    %c5_i32 = arith.constant 5 : i32
    %c7_i32_58 = arith.constant 7 : i32
    %222 = arith.subi %c7_i32_58, %c5_i32 : i32
    %c0_i32_59 = arith.constant 0 : i32
    %223 = vector.broadcast %c0_i32_59 : i32 to vector<2x64xi32>
    %224 = arith.cmpi eq, %19, %223 : vector<2x64xi32>
    %225 = arith.index_cast %c5_i32 : i32 to index
    %c0_60 = arith.constant 0 : index
    %226 = vector.load %arg4[%225, %c0_60] : memref<8x64xf32, #tpu.memory_space<vmem>>, vector<1x64xf32>
    %227 = arith.index_cast %222 : i32 to index
    %c0_61 = arith.constant 0 : index
    %228 = vector.load %arg5[%227, %c0_61] : memref<8x64xf32, #tpu.memory_space<vmem>>, vector<1x64xf32>
    %229 = vector.shape_cast %226 : vector<1x64xf32> to vector<1x64xf32>
    %230 = vector.broadcast %229 : vector<1x64xf32> to vector<2x64xf32>
    %231 = vector.shape_cast %228 : vector<1x64xf32> to vector<1x64xf32>
    %232 = vector.broadcast %231 : vector<1x64xf32> to vector<2x64xf32>
    %233 = arith.select %224, %230, %232 : vector<2x64xi1>, vector<2x64xf32>
    %cst_62 = arith.constant dense<0.000000e+00> : vector<2x64xf32>
    %234 = tpu.matmul %215, %13, %cst_62 {dimension_numbers = #tpu.dot_dimension_numbers<[1], [0], [0], [1], [0, 0, 1, 1], [], []>} : vector<2x16xf32>, vector<16x64xf32>, vector<2x64xf32> -> vector<2x64xf32>
    %cst_63 = arith.constant dense<0.000000e+00> : vector<2x64xf32>
    %235 = tpu.matmul %215, %14, %cst_63 {dimension_numbers = #tpu.dot_dimension_numbers<[1], [0], [0], [1], [0, 0, 1, 1], [], []>} : vector<2x16xf32>, vector<16x64xf32>, vector<2x64xf32> -> vector<2x64xf32>
    %c0_i32_64 = arith.constant 0 : i32
    %236 = vector.broadcast %c0_i32_64 : i32 to vector<2x64xi32>
    %237 = arith.cmpi eq, %19, %236 : vector<2x64xi32>
    %238 = arith.select %237, %234, %235 : vector<2x64xi1>, vector<2x64xf32>
    %239 = arith.addf %233, %238 : vector<2x64xf32>
    %240 = math.tanh %239 : vector<2x64xf32>
    %241 = vector.broadcast %28 : vector<1x64xf32> to vector<2x64xf32>
    %242 = arith.mulf %240, %241 : vector<2x64xf32>
    %243 = vector.broadcast %31 : vector<1x64xf32> to vector<2x64xf32>
    %244 = arith.addf %242, %243 : vector<2x64xf32>
    %245 = vector.extract_strided_slice %244 {offsets = [0, 0], sizes = [2, 16], strides = [1, 1]} : vector<2x64xf32> to vector<2x16xf32>
    %246 = vector.extract_strided_slice %244 {offsets = [0, 16], sizes = [2, 16], strides = [1, 1]} : vector<2x64xf32> to vector<2x16xf32>
    %247 = vector.extract_strided_slice %244 {offsets = [0, 32], sizes = [2, 16], strides = [1, 1]} : vector<2x64xf32> to vector<2x16xf32>
    %248 = vector.extract_strided_slice %244 {offsets = [0, 48], sizes = [2, 16], strides = [1, 1]} : vector<2x64xf32> to vector<2x16xf32>
    %249 = arith.mulf %246, %213 : vector<2x16xf32>
    %250 = arith.mulf %245, %247 : vector<2x16xf32>
    %251 = arith.addf %249, %250 : vector<2x16xf32>
    %252 = math.tanh %251 : vector<2x16xf32>
    %253 = arith.mulf %248, %252 : vector<2x16xf32>
    %254 = vector.extract_strided_slice %253 {offsets = [0, 0], sizes = [1, 16], strides = [1, 1]} : vector<2x16xf32> to vector<1x16xf32>
    %255 = arith.index_cast %c5_i32 : i32 to index
    %c0_65 = arith.constant 0 : index
    %256 = vector.load %arg6[%255, %c0_65] : memref<8x16xf32, #tpu.memory_space<vmem>>, vector<1x16xf32>
    tpu.vector_store %arg6[%255, %c0_65], %254 {strides = array<i32>} : memref<8x16xf32, #tpu.memory_space<vmem>>, vector<1x16xf32>,
    %257 = vector.extract_strided_slice %253 {offsets = [1, 0], sizes = [1, 16], strides = [1, 1]} : vector<2x16xf32> to vector<1x16xf32>
    %258 = arith.index_cast %222 : i32 to index
    %c0_66 = arith.constant 0 : index
    %259 = vector.load %arg7[%258, %c0_66] : memref<8x16xf32, #tpu.memory_space<vmem>>, vector<1x16xf32>
    tpu.vector_store %arg7[%258, %c0_66], %257 {strides = array<i32>} : memref<8x16xf32, #tpu.memory_space<vmem>>, vector<1x16xf32>,
    %c6_i32 = arith.constant 6 : i32
    %c7_i32_67 = arith.constant 7 : i32
    %260 = arith.subi %c7_i32_67, %c6_i32 : i32
    %c0_i32_68 = arith.constant 0 : i32
    %261 = vector.broadcast %c0_i32_68 : i32 to vector<2x64xi32>
    %262 = arith.cmpi eq, %19, %261 : vector<2x64xi32>
    %263 = arith.index_cast %c6_i32 : i32 to index
    %c0_69 = arith.constant 0 : index
    %264 = vector.load %arg4[%263, %c0_69] : memref<8x64xf32, #tpu.memory_space<vmem>>, vector<1x64xf32>
    %265 = arith.index_cast %260 : i32 to index
    %c0_70 = arith.constant 0 : index
    %266 = vector.load %arg5[%265, %c0_70] : memref<8x64xf32, #tpu.memory_space<vmem>>, vector<1x64xf32>
    %267 = vector.shape_cast %264 : vector<1x64xf32> to vector<1x64xf32>
    %268 = vector.broadcast %267 : vector<1x64xf32> to vector<2x64xf32>
    %269 = vector.shape_cast %266 : vector<1x64xf32> to vector<1x64xf32>
    %270 = vector.broadcast %269 : vector<1x64xf32> to vector<2x64xf32>
    %271 = arith.select %262, %268, %270 : vector<2x64xi1>, vector<2x64xf32>
    %cst_71 = arith.constant dense<0.000000e+00> : vector<2x64xf32>
    %272 = tpu.matmul %253, %13, %cst_71 {dimension_numbers = #tpu.dot_dimension_numbers<[1], [0], [0], [1], [0, 0, 1, 1], [], []>} : vector<2x16xf32>, vector<16x64xf32>, vector<2x64xf32> -> vector<2x64xf32>
    %cst_72 = arith.constant dense<0.000000e+00> : vector<2x64xf32>
    %273 = tpu.matmul %253, %14, %cst_72 {dimension_numbers = #tpu.dot_dimension_numbers<[1], [0], [0], [1], [0, 0, 1, 1], [], []>} : vector<2x16xf32>, vector<16x64xf32>, vector<2x64xf32> -> vector<2x64xf32>
    %c0_i32_73 = arith.constant 0 : i32
    %274 = vector.broadcast %c0_i32_73 : i32 to vector<2x64xi32>
    %275 = arith.cmpi eq, %19, %274 : vector<2x64xi32>
    %276 = arith.select %275, %272, %273 : vector<2x64xi1>, vector<2x64xf32>
    %277 = arith.addf %271, %276 : vector<2x64xf32>
    %278 = math.tanh %277 : vector<2x64xf32>
    %279 = vector.broadcast %28 : vector<1x64xf32> to vector<2x64xf32>
    %280 = arith.mulf %278, %279 : vector<2x64xf32>
    %281 = vector.broadcast %31 : vector<1x64xf32> to vector<2x64xf32>
    %282 = arith.addf %280, %281 : vector<2x64xf32>
    %283 = vector.extract_strided_slice %282 {offsets = [0, 0], sizes = [2, 16], strides = [1, 1]} : vector<2x64xf32> to vector<2x16xf32>
    %284 = vector.extract_strided_slice %282 {offsets = [0, 16], sizes = [2, 16], strides = [1, 1]} : vector<2x64xf32> to vector<2x16xf32>
    %285 = vector.extract_strided_slice %282 {offsets = [0, 32], sizes = [2, 16], strides = [1, 1]} : vector<2x64xf32> to vector<2x16xf32>
    %286 = vector.extract_strided_slice %282 {offsets = [0, 48], sizes = [2, 16], strides = [1, 1]} : vector<2x64xf32> to vector<2x16xf32>
    %287 = arith.mulf %284, %251 : vector<2x16xf32>
    %288 = arith.mulf %283, %285 : vector<2x16xf32>
    %289 = arith.addf %287, %288 : vector<2x16xf32>
    %290 = math.tanh %289 : vector<2x16xf32>
    %291 = arith.mulf %286, %290 : vector<2x16xf32>
    %292 = vector.extract_strided_slice %291 {offsets = [0, 0], sizes = [1, 16], strides = [1, 1]} : vector<2x16xf32> to vector<1x16xf32>
    %293 = arith.index_cast %c6_i32 : i32 to index
    %c0_74 = arith.constant 0 : index
    %294 = vector.load %arg6[%293, %c0_74] : memref<8x16xf32, #tpu.memory_space<vmem>>, vector<1x16xf32>
    tpu.vector_store %arg6[%293, %c0_74], %292 {strides = array<i32>} : memref<8x16xf32, #tpu.memory_space<vmem>>, vector<1x16xf32>,
    %295 = vector.extract_strided_slice %291 {offsets = [1, 0], sizes = [1, 16], strides = [1, 1]} : vector<2x16xf32> to vector<1x16xf32>
    %296 = arith.index_cast %260 : i32 to index
    %c0_75 = arith.constant 0 : index
    %297 = vector.load %arg7[%296, %c0_75] : memref<8x16xf32, #tpu.memory_space<vmem>>, vector<1x16xf32>
    tpu.vector_store %arg7[%296, %c0_75], %295 {strides = array<i32>} : memref<8x16xf32, #tpu.memory_space<vmem>>, vector<1x16xf32>,
    %c7_i32_76 = arith.constant 7 : i32
    %c7_i32_77 = arith.constant 7 : i32
    %298 = arith.subi %c7_i32_77, %c7_i32_76 : i32
    %c0_i32_78 = arith.constant 0 : i32
    %299 = vector.broadcast %c0_i32_78 : i32 to vector<2x64xi32>
    %300 = arith.cmpi eq, %19, %299 : vector<2x64xi32>
    %301 = arith.index_cast %c7_i32_76 : i32 to index
    %c0_79 = arith.constant 0 : index
    %302 = vector.load %arg4[%301, %c0_79] : memref<8x64xf32, #tpu.memory_space<vmem>>, vector<1x64xf32>
    %303 = arith.index_cast %298 : i32 to index
    %c0_80 = arith.constant 0 : index
    %304 = vector.load %arg5[%303, %c0_80] : memref<8x64xf32, #tpu.memory_space<vmem>>, vector<1x64xf32>
    %305 = vector.shape_cast %302 : vector<1x64xf32> to vector<1x64xf32>
    %306 = vector.broadcast %305 : vector<1x64xf32> to vector<2x64xf32>
    %307 = vector.shape_cast %304 : vector<1x64xf32> to vector<1x64xf32>
    %308 = vector.broadcast %307 : vector<1x64xf32> to vector<2x64xf32>
    %309 = arith.select %300, %306, %308 : vector<2x64xi1>, vector<2x64xf32>
    %cst_81 = arith.constant dense<0.000000e+00> : vector<2x64xf32>
    %310 = tpu.matmul %291, %13, %cst_81 {dimension_numbers = #tpu.dot_dimension_numbers<[1], [0], [0], [1], [0, 0, 1, 1], [], []>} : vector<2x16xf32>, vector<16x64xf32>, vector<2x64xf32> -> vector<2x64xf32>
    %cst_82 = arith.constant dense<0.000000e+00> : vector<2x64xf32>
    %311 = tpu.matmul %291, %14, %cst_82 {dimension_numbers = #tpu.dot_dimension_numbers<[1], [0], [0], [1], [0, 0, 1, 1], [], []>} : vector<2x16xf32>, vector<16x64xf32>, vector<2x64xf32> -> vector<2x64xf32>
    %c0_i32_83 = arith.constant 0 : i32
    %312 = vector.broadcast %c0_i32_83 : i32 to vector<2x64xi32>
    %313 = arith.cmpi eq, %19, %312 : vector<2x64xi32>
    %314 = arith.select %313, %310, %311 : vector<2x64xi1>, vector<2x64xf32>
    %315 = arith.addf %309, %314 : vector<2x64xf32>
    %316 = math.tanh %315 : vector<2x64xf32>
    %317 = vector.broadcast %28 : vector<1x64xf32> to vector<2x64xf32>
    %318 = arith.mulf %316, %317 : vector<2x64xf32>
    %319 = vector.broadcast %31 : vector<1x64xf32> to vector<2x64xf32>
    %320 = arith.addf %318, %319 : vector<2x64xf32>
    %321 = vector.extract_strided_slice %320 {offsets = [0, 0], sizes = [2, 16], strides = [1, 1]} : vector<2x64xf32> to vector<2x16xf32>
    %322 = vector.extract_strided_slice %320 {offsets = [0, 16], sizes = [2, 16], strides = [1, 1]} : vector<2x64xf32> to vector<2x16xf32>
    %323 = vector.extract_strided_slice %320 {offsets = [0, 32], sizes = [2, 16], strides = [1, 1]} : vector<2x64xf32> to vector<2x16xf32>
    %324 = vector.extract_strided_slice %320 {offsets = [0, 48], sizes = [2, 16], strides = [1, 1]} : vector<2x64xf32> to vector<2x16xf32>
    %325 = arith.mulf %322, %289 : vector<2x16xf32>
    %326 = arith.mulf %321, %323 : vector<2x16xf32>
    %327 = arith.addf %325, %326 : vector<2x16xf32>
    %328 = math.tanh %327 : vector<2x16xf32>
    %329 = arith.mulf %324, %328 : vector<2x16xf32>
    %330 = vector.extract_strided_slice %329 {offsets = [0, 0], sizes = [1, 16], strides = [1, 1]} : vector<2x16xf32> to vector<1x16xf32>
    %331 = arith.index_cast %c7_i32_76 : i32 to index
    %c0_84 = arith.constant 0 : index
    %332 = vector.load %arg6[%331, %c0_84] : memref<8x16xf32, #tpu.memory_space<vmem>>, vector<1x16xf32>
    tpu.vector_store %arg6[%331, %c0_84], %330 {strides = array<i32>} : memref<8x16xf32, #tpu.memory_space<vmem>>, vector<1x16xf32>,
    %333 = vector.extract_strided_slice %329 {offsets = [1, 0], sizes = [1, 16], strides = [1, 1]} : vector<2x16xf32> to vector<1x16xf32>
    %334 = arith.index_cast %298 : i32 to index
    %c0_85 = arith.constant 0 : index
    %335 = vector.load %arg7[%334, %c0_85] : memref<8x16xf32, #tpu.memory_space<vmem>>, vector<1x16xf32>
    tpu.vector_store %arg7[%334, %c0_85], %333 {strides = array<i32>} : memref<8x16xf32, #tpu.memory_space<vmem>>, vector<1x16xf32>,
    %c8_i32 = arith.constant 8 : i32
    %c0_86 = arith.constant 0 : index
    %c0_87 = arith.constant 0 : index
    %336 = vector.load %arg6[%c0_86, %c0_87] : memref<8x16xf32, #tpu.memory_space<vmem>>, vector<8x16xf32>
    %c40 = arith.constant 40 : index
    %c0_88 = arith.constant 0 : index
    %337 = vector.load %arg2[%c40, %c0_88] : memref<112x128xf32, #tpu.memory_space<vmem>>, vector<16x128xf32>
    %cst_89 = arith.constant dense<0.000000e+00> : vector<8x128xf32>
    %338 = tpu.matmul %336, %337, %cst_89 {dimension_numbers = #tpu.dot_dimension_numbers<[1], [0], [0], [1], [0, 0, 1, 1], [], []>} : vector<8x16xf32>, vector<16x128xf32>, vector<8x128xf32> -> vector<8x128xf32>
    %c0_90 = arith.constant 0 : index
    %c0_91 = arith.constant 0 : index
    %339 = vector.load %arg7[%c0_90, %c0_91] : memref<8x16xf32, #tpu.memory_space<vmem>>, vector<8x16xf32>
    %c56 = arith.constant 56 : index
    %c0_92 = arith.constant 0 : index
    %340 = vector.load %arg2[%c56, %c0_92] : memref<112x128xf32, #tpu.memory_space<vmem>>, vector<16x128xf32>
    %cst_93 = arith.constant dense<0.000000e+00> : vector<8x128xf32>
    %341 = tpu.matmul %339, %340, %cst_93 {dimension_numbers = #tpu.dot_dimension_numbers<[1], [0], [0], [1], [0, 0, 1, 1], [], []>} : vector<8x16xf32>, vector<16x128xf32>, vector<8x128xf32> -> vector<8x128xf32>
    %342 = arith.addf %338, %341 : vector<8x128xf32>
    %c72 = arith.constant 72 : index
    %c0_94 = arith.constant 0 : index
    %343 = vector.load %arg2[%c72, %c0_94] : memref<112x128xf32, #tpu.memory_space<vmem>>, vector<1x128xf32>
    %344 = vector.broadcast %343 : vector<1x128xf32> to vector<8x128xf32>
    %345 = arith.addf %342, %344 : vector<8x128xf32>
    %c0_95 = arith.constant 0 : index
    %c0_96 = arith.constant 0 : index
    %346 = vector.load %arg3[%c0_95, %c0_96] : memref<16x128xf32, #tpu.memory_space<vmem>>, vector<8x128xf32>
    tpu.vector_store %arg3[%c0_95, %c0_96], %345 {strides = array<i32>} : memref<16x128xf32, #tpu.memory_space<vmem>>, vector<8x128xf32>,
    %c80 = arith.constant 80 : index
    %c0_97 = arith.constant 0 : index
    %347 = vector.load %arg2[%c80, %c0_97] : memref<112x128xf32, #tpu.memory_space<vmem>>, vector<6x128xf32>
    %348 = vector.extract_strided_slice %347 {offsets = [0, 0], sizes = [6, 6], strides = [1, 1]} : vector<6x128xf32> to vector<6x6xf32>
    %c88 = arith.constant 88 : index
    %c0_98 = arith.constant 0 : index
    %349 = vector.load %arg2[%c88, %c0_98] : memref<112x128xf32, #tpu.memory_space<vmem>>, vector<1x128xf32>
    %350 = vector.extract_strided_slice %349 {offsets = [0, 0], sizes = [1, 6], strides = [1, 1]} : vector<1x128xf32> to vector<1x6xf32>
    %351 = tpu.iota {dimensions = array<i32: 0>} : vector<6x6xi32>
    %352 = arith.sitofp %351 : vector<6x6xi32> to vector<6x6xf32>
    %353 = tpu.iota {dimensions = array<i32: 0>} : vector<6x6xi32>
    %354 = tpu.iota {dimensions = array<i32: 1>} : vector<6x6xi32>
    %355 = arith.cmpi eq, %353, %354 : vector<6x6xi32>
    %356 = arith.extui %355 : vector<6x6xi1> to vector<6x6xi32>
    %357 = arith.sitofp %356 : vector<6x6xi32> to vector<6x6xf32>
    %358 = tpu.iota {dimensions = array<i32: 1>} : vector<1x6xi32>
    %359 = arith.sitofp %358 : vector<1x6xi32> to vector<1x6xf32>
    %c4_i32_99 = arith.constant 4 : i32
    %360 = vector.broadcast %c4_i32_99 : i32 to vector<1x6xi32>
    %361 = arith.cmpi eq, %358, %360 : vector<1x6xi32>
    %cst_100 = arith.constant 0.000000e+00 : f32
    %cst_101 = arith.constant -1.000000e+04 : f32
    %362 = vector.broadcast %cst_100 : f32 to vector<1x6xf32>
    %363 = vector.broadcast %cst_101 : f32 to vector<1x6xf32>
    %364 = arith.select %361, %362, %363 : vector<1x6xi1>, vector<1x6xf32>
    %c0_i32_102 = arith.constant 0 : i32
    %365 = vector.broadcast %364 : vector<1x6xf32> to vector<6x6xf32>
    %366 = arith.mulf %357, %365 : vector<6x6xf32>
    %cst_103 = arith.constant dense<0.000000e+00> : vector<6xf32>
    %367 = vector.multi_reduction <add>, %366, %cst_103 [1] : vector<6x6xf32> to vector<6xf32>
    %368 = vector.shape_cast %367 : vector<6xf32> to vector<6x1xf32>
    %369 = vector.broadcast %368 : vector<6x1xf32> to vector<6x6xf32>
    %370 = arith.addf %369, %348 : vector<6x6xf32>
    %cst_104 = arith.constant dense<0xFF800000> : vector<6xf32>
    %371 = vector.multi_reduction <maximumf>, %370, %cst_104 [0] : vector<6x6xf32> to vector<6xf32>
    %372 = vector.shape_cast %371 : vector<6xf32> to vector<1x6xf32>
    %373 = vector.broadcast %372 : vector<1x6xf32> to vector<6x6xf32>
    %374 = arith.cmpf oeq, %370, %373 : vector<6x6xf32>
    %cst_105 = arith.constant 6.000000e+00 : f32
    %375 = vector.broadcast %cst_105 : f32 to vector<6x6xf32>
    %376 = arith.select %374, %352, %375 : vector<6x6xi1>, vector<6x6xf32>
    %cst_106 = arith.constant dense<0x7F800000> : vector<6xf32>
    %377 = vector.multi_reduction <minimumf>, %376, %cst_106 [0] : vector<6x6xf32> to vector<6xf32>
    %378 = vector.shape_cast %377 : vector<6xf32> to vector<1x6xf32>
    %379 = arith.index_cast %c0_i32_102 : i32 to index
    %c0_107 = arith.constant 0 : index
    %380 = vector.load %arg8[%379, %c0_107] : memref<8x6xf32, #tpu.memory_space<vmem>>, vector<1x6xf32>
    tpu.vector_store %arg8[%379, %c0_107], %378 {strides = array<i32>} : memref<8x6xf32, #tpu.memory_space<vmem>>, vector<1x6xf32>,
    %381 = arith.index_cast %c0_i32_102 : i32 to index
    %c0_108 = arith.constant 0 : index
    %382 = vector.load %arg3[%381, %c0_108] : memref<16x128xf32, #tpu.memory_space<vmem>>, vector<1x128xf32>
    %383 = vector.extract_strided_slice %382 {offsets = [0, 0], sizes = [1, 6], strides = [1, 1]} : vector<1x128xf32> to vector<1x6xf32>
    %384 = arith.addf %372, %383 : vector<1x6xf32>
    %c1_i32_109 = arith.constant 1 : i32
    %385 = vector.broadcast %384 : vector<1x6xf32> to vector<6x6xf32>
    %386 = arith.mulf %357, %385 : vector<6x6xf32>
    %cst_110 = arith.constant dense<0.000000e+00> : vector<6xf32>
    %387 = vector.multi_reduction <add>, %386, %cst_110 [1] : vector<6x6xf32> to vector<6xf32>
    %388 = vector.shape_cast %387 : vector<6xf32> to vector<6x1xf32>
    %389 = vector.broadcast %388 : vector<6x1xf32> to vector<6x6xf32>
    %390 = arith.addf %389, %348 : vector<6x6xf32>
    %cst_111 = arith.constant dense<0xFF800000> : vector<6xf32>
    %391 = vector.multi_reduction <maximumf>, %390, %cst_111 [0] : vector<6x6xf32> to vector<6xf32>
    %392 = vector.shape_cast %391 : vector<6xf32> to vector<1x6xf32>
    %393 = vector.broadcast %392 : vector<1x6xf32> to vector<6x6xf32>
    %394 = arith.cmpf oeq, %390, %393 : vector<6x6xf32>
    %cst_112 = arith.constant 6.000000e+00 : f32
    %395 = vector.broadcast %cst_112 : f32 to vector<6x6xf32>
    %396 = arith.select %394, %352, %395 : vector<6x6xi1>, vector<6x6xf32>
    %cst_113 = arith.constant dense<0x7F800000> : vector<6xf32>
    %397 = vector.multi_reduction <minimumf>, %396, %cst_113 [0] : vector<6x6xf32> to vector<6xf32>
    %398 = vector.shape_cast %397 : vector<6xf32> to vector<1x6xf32>
    %399 = arith.index_cast %c1_i32_109 : i32 to index
    %c0_114 = arith.constant 0 : index
    %400 = vector.load %arg8[%399, %c0_114] : memref<8x6xf32, #tpu.memory_space<vmem>>, vector<1x6xf32>
    tpu.vector_store %arg8[%399, %c0_114], %398 {strides = array<i32>} : memref<8x6xf32, #tpu.memory_space<vmem>>, vector<1x6xf32>,
    %401 = arith.index_cast %c1_i32_109 : i32 to index
    %c0_115 = arith.constant 0 : index
    %402 = vector.load %arg3[%401, %c0_115] : memref<16x128xf32, #tpu.memory_space<vmem>>, vector<1x128xf32>
    %403 = vector.extract_strided_slice %402 {offsets = [0, 0], sizes = [1, 6], strides = [1, 1]} : vector<1x128xf32> to vector<1x6xf32>
    %404 = arith.addf %392, %403 : vector<1x6xf32>
    %c2_i32_116 = arith.constant 2 : i32
    %405 = vector.broadcast %404 : vector<1x6xf32> to vector<6x6xf32>
    %406 = arith.mulf %357, %405 : vector<6x6xf32>
    %cst_117 = arith.constant dense<0.000000e+00> : vector<6xf32>
    %407 = vector.multi_reduction <add>, %406, %cst_117 [1] : vector<6x6xf32> to vector<6xf32>
    %408 = vector.shape_cast %407 : vector<6xf32> to vector<6x1xf32>
    %409 = vector.broadcast %408 : vector<6x1xf32> to vector<6x6xf32>
    %410 = arith.addf %409, %348 : vector<6x6xf32>
    %cst_118 = arith.constant dense<0xFF800000> : vector<6xf32>
    %411 = vector.multi_reduction <maximumf>, %410, %cst_118 [0] : vector<6x6xf32> to vector<6xf32>
    %412 = vector.shape_cast %411 : vector<6xf32> to vector<1x6xf32>
    %413 = vector.broadcast %412 : vector<1x6xf32> to vector<6x6xf32>
    %414 = arith.cmpf oeq, %410, %413 : vector<6x6xf32>
    %cst_119 = arith.constant 6.000000e+00 : f32
    %415 = vector.broadcast %cst_119 : f32 to vector<6x6xf32>
    %416 = arith.select %414, %352, %415 : vector<6x6xi1>, vector<6x6xf32>
    %cst_120 = arith.constant dense<0x7F800000> : vector<6xf32>
    %417 = vector.multi_reduction <minimumf>, %416, %cst_120 [0] : vector<6x6xf32> to vector<6xf32>
    %418 = vector.shape_cast %417 : vector<6xf32> to vector<1x6xf32>
    %419 = arith.index_cast %c2_i32_116 : i32 to index
    %c0_121 = arith.constant 0 : index
    %420 = vector.load %arg8[%419, %c0_121] : memref<8x6xf32, #tpu.memory_space<vmem>>, vector<1x6xf32>
    tpu.vector_store %arg8[%419, %c0_121], %418 {strides = array<i32>} : memref<8x6xf32, #tpu.memory_space<vmem>>, vector<1x6xf32>,
    %421 = arith.index_cast %c2_i32_116 : i32 to index
    %c0_122 = arith.constant 0 : index
    %422 = vector.load %arg3[%421, %c0_122] : memref<16x128xf32, #tpu.memory_space<vmem>>, vector<1x128xf32>
    %423 = vector.extract_strided_slice %422 {offsets = [0, 0], sizes = [1, 6], strides = [1, 1]} : vector<1x128xf32> to vector<1x6xf32>
    %424 = arith.addf %412, %423 : vector<1x6xf32>
    %c3_i32_123 = arith.constant 3 : i32
    %425 = vector.broadcast %424 : vector<1x6xf32> to vector<6x6xf32>
    %426 = arith.mulf %357, %425 : vector<6x6xf32>
    %cst_124 = arith.constant dense<0.000000e+00> : vector<6xf32>
    %427 = vector.multi_reduction <add>, %426, %cst_124 [1] : vector<6x6xf32> to vector<6xf32>
    %428 = vector.shape_cast %427 : vector<6xf32> to vector<6x1xf32>
    %429 = vector.broadcast %428 : vector<6x1xf32> to vector<6x6xf32>
    %430 = arith.addf %429, %348 : vector<6x6xf32>
    %cst_125 = arith.constant dense<0xFF800000> : vector<6xf32>
    %431 = vector.multi_reduction <maximumf>, %430, %cst_125 [0] : vector<6x6xf32> to vector<6xf32>
    %432 = vector.shape_cast %431 : vector<6xf32> to vector<1x6xf32>
    %433 = vector.broadcast %432 : vector<1x6xf32> to vector<6x6xf32>
    %434 = arith.cmpf oeq, %430, %433 : vector<6x6xf32>
    %cst_126 = arith.constant 6.000000e+00 : f32
    %435 = vector.broadcast %cst_126 : f32 to vector<6x6xf32>
    %436 = arith.select %434, %352, %435 : vector<6x6xi1>, vector<6x6xf32>
    %cst_127 = arith.constant dense<0x7F800000> : vector<6xf32>
    %437 = vector.multi_reduction <minimumf>, %436, %cst_127 [0] : vector<6x6xf32> to vector<6xf32>
    %438 = vector.shape_cast %437 : vector<6xf32> to vector<1x6xf32>
    %439 = arith.index_cast %c3_i32_123 : i32 to index
    %c0_128 = arith.constant 0 : index
    %440 = vector.load %arg8[%439, %c0_128] : memref<8x6xf32, #tpu.memory_space<vmem>>, vector<1x6xf32>
    tpu.vector_store %arg8[%439, %c0_128], %438 {strides = array<i32>} : memref<8x6xf32, #tpu.memory_space<vmem>>, vector<1x6xf32>,
    %441 = arith.index_cast %c3_i32_123 : i32 to index
    %c0_129 = arith.constant 0 : index
    %442 = vector.load %arg3[%441, %c0_129] : memref<16x128xf32, #tpu.memory_space<vmem>>, vector<1x128xf32>
    %443 = vector.extract_strided_slice %442 {offsets = [0, 0], sizes = [1, 6], strides = [1, 1]} : vector<1x128xf32> to vector<1x6xf32>
    %444 = arith.addf %432, %443 : vector<1x6xf32>
    %c4_i32_130 = arith.constant 4 : i32
    %445 = vector.broadcast %444 : vector<1x6xf32> to vector<6x6xf32>
    %446 = arith.mulf %357, %445 : vector<6x6xf32>
    %cst_131 = arith.constant dense<0.000000e+00> : vector<6xf32>
    %447 = vector.multi_reduction <add>, %446, %cst_131 [1] : vector<6x6xf32> to vector<6xf32>
    %448 = vector.shape_cast %447 : vector<6xf32> to vector<6x1xf32>
    %449 = vector.broadcast %448 : vector<6x1xf32> to vector<6x6xf32>
    %450 = arith.addf %449, %348 : vector<6x6xf32>
    %cst_132 = arith.constant dense<0xFF800000> : vector<6xf32>
    %451 = vector.multi_reduction <maximumf>, %450, %cst_132 [0] : vector<6x6xf32> to vector<6xf32>
    %452 = vector.shape_cast %451 : vector<6xf32> to vector<1x6xf32>
    %453 = vector.broadcast %452 : vector<1x6xf32> to vector<6x6xf32>
    %454 = arith.cmpf oeq, %450, %453 : vector<6x6xf32>
    %cst_133 = arith.constant 6.000000e+00 : f32
    %455 = vector.broadcast %cst_133 : f32 to vector<6x6xf32>
    %456 = arith.select %454, %352, %455 : vector<6x6xi1>, vector<6x6xf32>
    %cst_134 = arith.constant dense<0x7F800000> : vector<6xf32>
    %457 = vector.multi_reduction <minimumf>, %456, %cst_134 [0] : vector<6x6xf32> to vector<6xf32>
    %458 = vector.shape_cast %457 : vector<6xf32> to vector<1x6xf32>
    %459 = arith.index_cast %c4_i32_130 : i32 to index
    %c0_135 = arith.constant 0 : index
    %460 = vector.load %arg8[%459, %c0_135] : memref<8x6xf32, #tpu.memory_space<vmem>>, vector<1x6xf32>
    tpu.vector_store %arg8[%459, %c0_135], %458 {strides = array<i32>} : memref<8x6xf32, #tpu.memory_space<vmem>>, vector<1x6xf32>,
    %461 = arith.index_cast %c4_i32_130 : i32 to index
    %c0_136 = arith.constant 0 : index
    %462 = vector.load %arg3[%461, %c0_136] : memref<16x128xf32, #tpu.memory_space<vmem>>, vector<1x128xf32>
    %463 = vector.extract_strided_slice %462 {offsets = [0, 0], sizes = [1, 6], strides = [1, 1]} : vector<1x128xf32> to vector<1x6xf32>
    %464 = arith.addf %452, %463 : vector<1x6xf32>
    %c5_i32_137 = arith.constant 5 : i32
    %465 = vector.broadcast %464 : vector<1x6xf32> to vector<6x6xf32>
    %466 = arith.mulf %357, %465 : vector<6x6xf32>
    %cst_138 = arith.constant dense<0.000000e+00> : vector<6xf32>
    %467 = vector.multi_reduction <add>, %466, %cst_138 [1] : vector<6x6xf32> to vector<6xf32>
    %468 = vector.shape_cast %467 : vector<6xf32> to vector<6x1xf32>
    %469 = vector.broadcast %468 : vector<6x1xf32> to vector<6x6xf32>
    %470 = arith.addf %469, %348 : vector<6x6xf32>
    %cst_139 = arith.constant dense<0xFF800000> : vector<6xf32>
    %471 = vector.multi_reduction <maximumf>, %470, %cst_139 [0] : vector<6x6xf32> to vector<6xf32>
    %472 = vector.shape_cast %471 : vector<6xf32> to vector<1x6xf32>
    %473 = vector.broadcast %472 : vector<1x6xf32> to vector<6x6xf32>
    %474 = arith.cmpf oeq, %470, %473 : vector<6x6xf32>
    %cst_140 = arith.constant 6.000000e+00 : f32
    %475 = vector.broadcast %cst_140 : f32 to vector<6x6xf32>
    %476 = arith.select %474, %352, %475 : vector<6x6xi1>, vector<6x6xf32>
    %cst_141 = arith.constant dense<0x7F800000> : vector<6xf32>
    %477 = vector.multi_reduction <minimumf>, %476, %cst_141 [0] : vector<6x6xf32> to vector<6xf32>
    %478 = vector.shape_cast %477 : vector<6xf32> to vector<1x6xf32>
    %479 = arith.index_cast %c5_i32_137 : i32 to index
    %c0_142 = arith.constant 0 : index
    %480 = vector.load %arg8[%479, %c0_142] : memref<8x6xf32, #tpu.memory_space<vmem>>, vector<1x6xf32>
    tpu.vector_store %arg8[%479, %c0_142], %478 {strides = array<i32>} : memref<8x6xf32, #tpu.memory_space<vmem>>, vector<1x6xf32>,
    %481 = arith.index_cast %c5_i32_137 : i32 to index
    %c0_143 = arith.constant 0 : index
    %482 = vector.load %arg3[%481, %c0_143] : memref<16x128xf32, #tpu.memory_space<vmem>>, vector<1x128xf32>
    %483 = vector.extract_strided_slice %482 {offsets = [0, 0], sizes = [1, 6], strides = [1, 1]} : vector<1x128xf32> to vector<1x6xf32>
    %484 = arith.addf %472, %483 : vector<1x6xf32>
    %c6_i32_144 = arith.constant 6 : i32
    %485 = vector.broadcast %484 : vector<1x6xf32> to vector<6x6xf32>
    %486 = arith.mulf %357, %485 : vector<6x6xf32>
    %cst_145 = arith.constant dense<0.000000e+00> : vector<6xf32>
    %487 = vector.multi_reduction <add>, %486, %cst_145 [1] : vector<6x6xf32> to vector<6xf32>
    %488 = vector.shape_cast %487 : vector<6xf32> to vector<6x1xf32>
    %489 = vector.broadcast %488 : vector<6x1xf32> to vector<6x6xf32>
    %490 = arith.addf %489, %348 : vector<6x6xf32>
    %cst_146 = arith.constant dense<0xFF800000> : vector<6xf32>
    %491 = vector.multi_reduction <maximumf>, %490, %cst_146 [0] : vector<6x6xf32> to vector<6xf32>
    %492 = vector.shape_cast %491 : vector<6xf32> to vector<1x6xf32>
    %493 = vector.broadcast %492 : vector<1x6xf32> to vector<6x6xf32>
    %494 = arith.cmpf oeq, %490, %493 : vector<6x6xf32>
    %cst_147 = arith.constant 6.000000e+00 : f32
    %495 = vector.broadcast %cst_147 : f32 to vector<6x6xf32>
    %496 = arith.select %494, %352, %495 : vector<6x6xi1>, vector<6x6xf32>
    %cst_148 = arith.constant dense<0x7F800000> : vector<6xf32>
    %497 = vector.multi_reduction <minimumf>, %496, %cst_148 [0] : vector<6x6xf32> to vector<6xf32>
    %498 = vector.shape_cast %497 : vector<6xf32> to vector<1x6xf32>
    %499 = arith.index_cast %c6_i32_144 : i32 to index
    %c0_149 = arith.constant 0 : index
    %500 = vector.load %arg8[%499, %c0_149] : memref<8x6xf32, #tpu.memory_space<vmem>>, vector<1x6xf32>
    tpu.vector_store %arg8[%499, %c0_149], %498 {strides = array<i32>} : memref<8x6xf32, #tpu.memory_space<vmem>>, vector<1x6xf32>,
    %501 = arith.index_cast %c6_i32_144 : i32 to index
    %c0_150 = arith.constant 0 : index
    %502 = vector.load %arg3[%501, %c0_150] : memref<16x128xf32, #tpu.memory_space<vmem>>, vector<1x128xf32>
    %503 = vector.extract_strided_slice %502 {offsets = [0, 0], sizes = [1, 6], strides = [1, 1]} : vector<1x128xf32> to vector<1x6xf32>
    %504 = arith.addf %492, %503 : vector<1x6xf32>
    %c7_i32_151 = arith.constant 7 : i32
    %505 = vector.broadcast %504 : vector<1x6xf32> to vector<6x6xf32>
    %506 = arith.mulf %357, %505 : vector<6x6xf32>
    %cst_152 = arith.constant dense<0.000000e+00> : vector<6xf32>
    %507 = vector.multi_reduction <add>, %506, %cst_152 [1] : vector<6x6xf32> to vector<6xf32>
    %508 = vector.shape_cast %507 : vector<6xf32> to vector<6x1xf32>
    %509 = vector.broadcast %508 : vector<6x1xf32> to vector<6x6xf32>
    %510 = arith.addf %509, %348 : vector<6x6xf32>
    %cst_153 = arith.constant dense<0xFF800000> : vector<6xf32>
    %511 = vector.multi_reduction <maximumf>, %510, %cst_153 [0] : vector<6x6xf32> to vector<6xf32>
    %512 = vector.shape_cast %511 : vector<6xf32> to vector<1x6xf32>
    %513 = vector.broadcast %512 : vector<1x6xf32> to vector<6x6xf32>
    %514 = arith.cmpf oeq, %510, %513 : vector<6x6xf32>
    %cst_154 = arith.constant 6.000000e+00 : f32
    %515 = vector.broadcast %cst_154 : f32 to vector<6x6xf32>
    %516 = arith.select %514, %352, %515 : vector<6x6xi1>, vector<6x6xf32>
    %cst_155 = arith.constant dense<0x7F800000> : vector<6xf32>
    %517 = vector.multi_reduction <minimumf>, %516, %cst_155 [0] : vector<6x6xf32> to vector<6xf32>
    %518 = vector.shape_cast %517 : vector<6xf32> to vector<1x6xf32>
    %519 = arith.index_cast %c7_i32_151 : i32 to index
    %c0_156 = arith.constant 0 : index
    %520 = vector.load %arg8[%519, %c0_156] : memref<8x6xf32, #tpu.memory_space<vmem>>, vector<1x6xf32>
    tpu.vector_store %arg8[%519, %c0_156], %518 {strides = array<i32>} : memref<8x6xf32, #tpu.memory_space<vmem>>, vector<1x6xf32>,
    %521 = arith.index_cast %c7_i32_151 : i32 to index
    %c0_157 = arith.constant 0 : index
    %522 = vector.load %arg3[%521, %c0_157] : memref<16x128xf32, #tpu.memory_space<vmem>>, vector<1x128xf32>
    %523 = vector.extract_strided_slice %522 {offsets = [0, 0], sizes = [1, 6], strides = [1, 1]} : vector<1x128xf32> to vector<1x6xf32>
    %524 = arith.addf %512, %523 : vector<1x6xf32>
    %c8_i32_158 = arith.constant 8 : i32
    %525 = arith.addf %524, %350 : vector<1x6xf32>
    %cst_159 = arith.constant dense<0xFF800000> : vector<1xf32>
    %526 = vector.multi_reduction <maximumf>, %525, %cst_159 [1] : vector<1x6xf32> to vector<1xf32>
    %527 = vector.shape_cast %526 : vector<1xf32> to vector<1x1xf32>
    %528 = vector.broadcast %527 : vector<1x1xf32> to vector<1x6xf32>
    %529 = arith.cmpf oeq, %525, %528 : vector<1x6xf32>
    %cst_160 = arith.constant 6.000000e+00 : f32
    %530 = vector.broadcast %cst_160 : f32 to vector<1x6xf32>
    %531 = arith.select %529, %359, %530 : vector<1x6xi1>, vector<1x6xf32>
    %cst_161 = arith.constant dense<0x7F800000> : vector<1xf32>
    %532 = vector.multi_reduction <minimumf>, %531, %cst_161 [1] : vector<1x6xf32> to vector<1xf32>
    %533 = vector.shape_cast %532 : vector<1xf32> to vector<1x1xf32>
    %534 = tpu.iota {dimensions = array<i32: 1>} : vector<1x128xi32>
    %cst_162 = arith.constant 0.000000e+00 : f32
    %535 = vector.broadcast %cst_162 : f32 to vector<1x128xf32>
    %c0_i32_163 = arith.constant 0 : i32
    %c7_i32_164 = arith.constant 7 : i32
    %536 = arith.subi %c7_i32_164, %c0_i32_163 : i32
    %537 = vector.broadcast %536 : i32 to vector<1x128xi32>
    %538 = arith.cmpi eq, %534, %537 : vector<1x128xi32>
    %539 = vector.shape_cast %533 : vector<1x1xf32> to vector<1x1xf32>
    %540 = vector.broadcast %539 : vector<1x1xf32> to vector<1x128xf32>
    %541 = arith.select %538, %540, %535 : vector<1x128xi1>, vector<1x128xf32>
    %542 = arith.index_cast %536 : i32 to index
    %c0_165 = arith.constant 0 : index
    %543 = vector.load %arg8[%542, %c0_165] : memref<8x6xf32, #tpu.memory_space<vmem>>, vector<1x6xf32>
    %544 = vector.broadcast %533 : vector<1x1xf32> to vector<1x6xf32>
    %545 = arith.cmpf oeq, %359, %544 : vector<1x6xf32>
    %cst_166 = arith.constant 0.000000e+00 : f32
    %546 = vector.broadcast %cst_166 : f32 to vector<1x6xf32>
    %547 = arith.select %545, %543, %546 : vector<1x6xi1>, vector<1x6xf32>
    %cst_167 = arith.constant dense<0.000000e+00> : vector<1xf32>
    %548 = vector.multi_reduction <add>, %547, %cst_167 [1] : vector<1x6xf32> to vector<1xf32>
    %549 = vector.shape_cast %548 : vector<1xf32> to vector<1x1xf32>
    %c1_i32_168 = arith.constant 1 : i32
    %c7_i32_169 = arith.constant 7 : i32
    %550 = arith.subi %c7_i32_169, %c1_i32_168 : i32
    %551 = vector.broadcast %550 : i32 to vector<1x128xi32>
    %552 = arith.cmpi eq, %534, %551 : vector<1x128xi32>
    %553 = vector.shape_cast %549 : vector<1x1xf32> to vector<1x1xf32>
    %554 = vector.broadcast %553 : vector<1x1xf32> to vector<1x128xf32>
    %555 = arith.select %552, %554, %541 : vector<1x128xi1>, vector<1x128xf32>
    %556 = arith.index_cast %550 : i32 to index
    %c0_170 = arith.constant 0 : index
    %557 = vector.load %arg8[%556, %c0_170] : memref<8x6xf32, #tpu.memory_space<vmem>>, vector<1x6xf32>
    %558 = vector.broadcast %549 : vector<1x1xf32> to vector<1x6xf32>
    %559 = arith.cmpf oeq, %359, %558 : vector<1x6xf32>
    %cst_171 = arith.constant 0.000000e+00 : f32
    %560 = vector.broadcast %cst_171 : f32 to vector<1x6xf32>
    %561 = arith.select %559, %557, %560 : vector<1x6xi1>, vector<1x6xf32>
    %cst_172 = arith.constant dense<0.000000e+00> : vector<1xf32>
    %562 = vector.multi_reduction <add>, %561, %cst_172 [1] : vector<1x6xf32> to vector<1xf32>
    %563 = vector.shape_cast %562 : vector<1xf32> to vector<1x1xf32>
    %c2_i32_173 = arith.constant 2 : i32
    %c7_i32_174 = arith.constant 7 : i32
    %564 = arith.subi %c7_i32_174, %c2_i32_173 : i32
    %565 = vector.broadcast %564 : i32 to vector<1x128xi32>
    %566 = arith.cmpi eq, %534, %565 : vector<1x128xi32>
    %567 = vector.shape_cast %563 : vector<1x1xf32> to vector<1x1xf32>
    %568 = vector.broadcast %567 : vector<1x1xf32> to vector<1x128xf32>
    %569 = arith.select %566, %568, %555 : vector<1x128xi1>, vector<1x128xf32>
    %570 = arith.index_cast %564 : i32 to index
    %c0_175 = arith.constant 0 : index
    %571 = vector.load %arg8[%570, %c0_175] : memref<8x6xf32, #tpu.memory_space<vmem>>, vector<1x6xf32>
    %572 = vector.broadcast %563 : vector<1x1xf32> to vector<1x6xf32>
    %573 = arith.cmpf oeq, %359, %572 : vector<1x6xf32>
    %cst_176 = arith.constant 0.000000e+00 : f32
    %574 = vector.broadcast %cst_176 : f32 to vector<1x6xf32>
    %575 = arith.select %573, %571, %574 : vector<1x6xi1>, vector<1x6xf32>
    %cst_177 = arith.constant dense<0.000000e+00> : vector<1xf32>
    %576 = vector.multi_reduction <add>, %575, %cst_177 [1] : vector<1x6xf32> to vector<1xf32>
    %577 = vector.shape_cast %576 : vector<1xf32> to vector<1x1xf32>
    %c3_i32_178 = arith.constant 3 : i32
    %c7_i32_179 = arith.constant 7 : i32
    %578 = arith.subi %c7_i32_179, %c3_i32_178 : i32
    %579 = vector.broadcast %578 : i32 to vector<1x128xi32>
    %580 = arith.cmpi eq, %534, %579 : vector<1x128xi32>
    %581 = vector.shape_cast %577 : vector<1x1xf32> to vector<1x1xf32>
    %582 = vector.broadcast %581 : vector<1x1xf32> to vector<1x128xf32>
    %583 = arith.select %580, %582, %569 : vector<1x128xi1>, vector<1x128xf32>
    %584 = arith.index_cast %578 : i32 to index
    %c0_180 = arith.constant 0 : index
    %585 = vector.load %arg8[%584, %c0_180] : memref<8x6xf32, #tpu.memory_space<vmem>>, vector<1x6xf32>
    %586 = vector.broadcast %577 : vector<1x1xf32> to vector<1x6xf32>
    %587 = arith.cmpf oeq, %359, %586 : vector<1x6xf32>
    %cst_181 = arith.constant 0.000000e+00 : f32
    %588 = vector.broadcast %cst_181 : f32 to vector<1x6xf32>
    %589 = arith.select %587, %585, %588 : vector<1x6xi1>, vector<1x6xf32>
    %cst_182 = arith.constant dense<0.000000e+00> : vector<1xf32>
    %590 = vector.multi_reduction <add>, %589, %cst_182 [1] : vector<1x6xf32> to vector<1xf32>
    %591 = vector.shape_cast %590 : vector<1xf32> to vector<1x1xf32>
    %c4_i32_183 = arith.constant 4 : i32
    %c7_i32_184 = arith.constant 7 : i32
    %592 = arith.subi %c7_i32_184, %c4_i32_183 : i32
    %593 = vector.broadcast %592 : i32 to vector<1x128xi32>
    %594 = arith.cmpi eq, %534, %593 : vector<1x128xi32>
    %595 = vector.shape_cast %591 : vector<1x1xf32> to vector<1x1xf32>
    %596 = vector.broadcast %595 : vector<1x1xf32> to vector<1x128xf32>
    %597 = arith.select %594, %596, %583 : vector<1x128xi1>, vector<1x128xf32>
    %598 = arith.index_cast %592 : i32 to index
    %c0_185 = arith.constant 0 : index
    %599 = vector.load %arg8[%598, %c0_185] : memref<8x6xf32, #tpu.memory_space<vmem>>, vector<1x6xf32>
    %600 = vector.broadcast %591 : vector<1x1xf32> to vector<1x6xf32>
    %601 = arith.cmpf oeq, %359, %600 : vector<1x6xf32>
    %cst_186 = arith.constant 0.000000e+00 : f32
    %602 = vector.broadcast %cst_186 : f32 to vector<1x6xf32>
    %603 = arith.select %601, %599, %602 : vector<1x6xi1>, vector<1x6xf32>
    %cst_187 = arith.constant dense<0.000000e+00> : vector<1xf32>
    %604 = vector.multi_reduction <add>, %603, %cst_187 [1] : vector<1x6xf32> to vector<1xf32>
    %605 = vector.shape_cast %604 : vector<1xf32> to vector<1x1xf32>
    %c5_i32_188 = arith.constant 5 : i32
    %c7_i32_189 = arith.constant 7 : i32
    %606 = arith.subi %c7_i32_189, %c5_i32_188 : i32
    %607 = vector.broadcast %606 : i32 to vector<1x128xi32>
    %608 = arith.cmpi eq, %534, %607 : vector<1x128xi32>
    %609 = vector.shape_cast %605 : vector<1x1xf32> to vector<1x1xf32>
    %610 = vector.broadcast %609 : vector<1x1xf32> to vector<1x128xf32>
    %611 = arith.select %608, %610, %597 : vector<1x128xi1>, vector<1x128xf32>
    %612 = arith.index_cast %606 : i32 to index
    %c0_190 = arith.constant 0 : index
    %613 = vector.load %arg8[%612, %c0_190] : memref<8x6xf32, #tpu.memory_space<vmem>>, vector<1x6xf32>
    %614 = vector.broadcast %605 : vector<1x1xf32> to vector<1x6xf32>
    %615 = arith.cmpf oeq, %359, %614 : vector<1x6xf32>
    %cst_191 = arith.constant 0.000000e+00 : f32
    %616 = vector.broadcast %cst_191 : f32 to vector<1x6xf32>
    %617 = arith.select %615, %613, %616 : vector<1x6xi1>, vector<1x6xf32>
    %cst_192 = arith.constant dense<0.000000e+00> : vector<1xf32>
    %618 = vector.multi_reduction <add>, %617, %cst_192 [1] : vector<1x6xf32> to vector<1xf32>
    %619 = vector.shape_cast %618 : vector<1xf32> to vector<1x1xf32>
    %c6_i32_193 = arith.constant 6 : i32
    %c7_i32_194 = arith.constant 7 : i32
    %620 = arith.subi %c7_i32_194, %c6_i32_193 : i32
    %621 = vector.broadcast %620 : i32 to vector<1x128xi32>
    %622 = arith.cmpi eq, %534, %621 : vector<1x128xi32>
    %623 = vector.shape_cast %619 : vector<1x1xf32> to vector<1x1xf32>
    %624 = vector.broadcast %623 : vector<1x1xf32> to vector<1x128xf32>
    %625 = arith.select %622, %624, %611 : vector<1x128xi1>, vector<1x128xf32>
    %626 = arith.index_cast %620 : i32 to index
    %c0_195 = arith.constant 0 : index
    %627 = vector.load %arg8[%626, %c0_195] : memref<8x6xf32, #tpu.memory_space<vmem>>, vector<1x6xf32>
    %628 = vector.broadcast %619 : vector<1x1xf32> to vector<1x6xf32>
    %629 = arith.cmpf oeq, %359, %628 : vector<1x6xf32>
    %cst_196 = arith.constant 0.000000e+00 : f32
    %630 = vector.broadcast %cst_196 : f32 to vector<1x6xf32>
    %631 = arith.select %629, %627, %630 : vector<1x6xi1>, vector<1x6xf32>
    %cst_197 = arith.constant dense<0.000000e+00> : vector<1xf32>
    %632 = vector.multi_reduction <add>, %631, %cst_197 [1] : vector<1x6xf32> to vector<1xf32>
    %633 = vector.shape_cast %632 : vector<1xf32> to vector<1x1xf32>
    %c7_i32_198 = arith.constant 7 : i32
    %c7_i32_199 = arith.constant 7 : i32
    %634 = arith.subi %c7_i32_199, %c7_i32_198 : i32
    %635 = vector.broadcast %634 : i32 to vector<1x128xi32>
    %636 = arith.cmpi eq, %534, %635 : vector<1x128xi32>
    %637 = vector.shape_cast %633 : vector<1x1xf32> to vector<1x1xf32>
    %638 = vector.broadcast %637 : vector<1x1xf32> to vector<1x128xf32>
    %639 = arith.select %636, %638, %625 : vector<1x128xi1>, vector<1x128xf32>
    %640 = arith.index_cast %634 : i32 to index
    %c0_200 = arith.constant 0 : index
    %641 = vector.load %arg8[%640, %c0_200] : memref<8x6xf32, #tpu.memory_space<vmem>>, vector<1x6xf32>
    %642 = vector.broadcast %633 : vector<1x1xf32> to vector<1x6xf32>
    %643 = arith.cmpf oeq, %359, %642 : vector<1x6xf32>
    %cst_201 = arith.constant 0.000000e+00 : f32
    %644 = vector.broadcast %cst_201 : f32 to vector<1x6xf32>
    %645 = arith.select %643, %641, %644 : vector<1x6xi1>, vector<1x6xf32>
    %cst_202 = arith.constant dense<0.000000e+00> : vector<1xf32>
    %646 = vector.multi_reduction <add>, %645, %cst_202 [1] : vector<1x6xf32> to vector<1xf32>
    %647 = vector.shape_cast %646 : vector<1xf32> to vector<1x1xf32>
    %c8_i32_203 = arith.constant 8 : i32
    %c16_i32 = arith.constant 16 : i32
    %648 = vector.broadcast %c16_i32 : i32 to vector<1x128xi32>
    %649 = arith.cmpi eq, %534, %648 : vector<1x128xi32>
    %c17_i32 = arith.constant 17 : i32
    %650 = vector.broadcast %c17_i32 : i32 to vector<1x128xi32>
    %651 = arith.cmpi eq, %534, %650 : vector<1x128xi32>
    %652 = vector.shape_cast %647 : vector<1x1xf32> to vector<1x1xf32>
    %653 = vector.broadcast %652 : vector<1x1xf32> to vector<1x128xf32>
    %654 = arith.select %651, %653, %639 : vector<1x128xi1>, vector<1x128xf32>
    %655 = vector.shape_cast %527 : vector<1x1xf32> to vector<1x1xf32>
    %656 = vector.broadcast %655 : vector<1x1xf32> to vector<1x128xf32>
    %657 = arith.select %649, %656, %654 : vector<1x128xi1>, vector<1x128xf32>
    %658 = tpu.iota {dimensions = array<i32: 0>} : vector<8x128xi32>
    %c0_i32_204 = arith.constant 0 : i32
    %659 = vector.broadcast %c0_i32_204 : i32 to vector<8x128xi32>
    %660 = arith.cmpi eq, %658, %659 : vector<8x128xi32>
    %cst_205 = arith.constant 0.000000e+00 : f32
    %661 = vector.shape_cast %657 : vector<1x128xf32> to vector<1x128xf32>
    %662 = vector.broadcast %661 : vector<1x128xf32> to vector<8x128xf32>
    %663 = vector.broadcast %cst_205 : f32 to vector<8x128xf32>
    %664 = arith.select %660, %662, %663 : vector<8x128xi1>, vector<8x128xf32>
    %c8 = arith.constant 8 : index
    %c0_206 = arith.constant 0 : index
    %665 = vector.load %arg3[%c8, %c0_206] : memref<16x128xf32, #tpu.memory_space<vmem>>, vector<8x128xf32>
    tpu.vector_store %arg3[%c8, %c0_206], %664 {strides = array<i32>} : memref<16x128xf32, #tpu.memory_space<vmem>>, vector<8x128xf32>,
    return
  }
  func.func @transform_0(%arg0: i32) -> (i32, i32) {
    %c0_i32 = arith.constant 0 : i32
    %c0_i32_0 = arith.constant 0 : i32
    return %arg0, %c0_i32 : i32, i32
  }
  func.func @transform_1(%arg0: i32) -> (i32, i32) {
    %c0_i32 = arith.constant 0 : i32
    %c0_i32_0 = arith.constant 0 : i32
    %c0_i32_1 = arith.constant 0 : i32
    return %c0_i32, %c0_i32_0 : i32, i32
  }
  func.func @transform_2(%arg0: i32) -> (i32, i32) {
    %c0_i32 = arith.constant 0 : i32
    %c0_i32_0 = arith.constant 0 : i32
    return %arg0, %c0_i32 : i32, i32
  }
}

</mosaic_0001>

<llo_original>
// kernel: bilstm_crf_device.1
$region0: #{bilstm_crf_device.1}
  #allocation0 [shape = 'u32[]', space=smem, size = 0x4, offset = 0x4, fixed_abs, tag = 'smem constant byte address 0x4 - core index']
  #allocation1 [shape = 'u32[72,128]{1,0:T(1,128)}', space=vmem, size = 0x9000, scoped, tag = 'internal scratch']
  #allocation2 [shape = 'f32[8,64]{1,0:T(8,128)}', space=vmem, size = 0x1000, scoped, tag = 'scratch operand']
  #allocation3 [shape = 'f32[8,64]{1,0:T(8,128)}', space=vmem, size = 0x1000, scoped, tag = 'scratch operand']
  #allocation4 [shape = 'f32[8,16]{1,0:T(8,128)}', space=vmem, size = 0x1000, scoped, tag = 'scratch operand']
  #allocation5 [shape = 'f32[8,16]{1,0:T(8,128)}', space=vmem, size = 0x1000, scoped, tag = 'scratch operand']
  #allocation6 [shape = 'f32[8,6]{1,0:T(8,128)}', space=vmem, size = 0x1000, scoped, tag = 'scratch operand']
  %s0 = inlined_call_operand.vmem [shape: s32[16,1], index: 0, kind: input, shape index: {}]
  %s1 = inlined_call_operand.vmem [shape: f32[112,128], index: 1, kind: input, shape index: {}]
  %s2 = inlined_call_operand.hbm [shape: f32[32,128], index: 2, kind: output, shape index: {}]
  %s3 = sld [smem:[#allocation0]]
  $region41: #{bilstm_crf_device.1} parent=0
    _
  %s5 = ssub.s32 1, %s3
  %s6 = scalar_select 0, %s5, %s3
  $region1: #{bilstm_crf_device.1} parent=0
    #allocation7 [shape = 'u8[16384]{0}', space=vmem, size = 0x4000, scoped, tag = 'output window, operand 0']
    #allocation8 [shape = 's32[2]{0}', space=sflag, size = 0x8, scoped, tag = 'scoped memory for bilstm_crf_device.1']
    %7 = vsyncpa [#allocation8], 0
    %s8 = scalar_lea.sflag [#allocation8], 1
    %9 = vsyncpa %s8, 0
    loop: start=0, step=1, limit=4
    $region2: #{bilstm_crf_device.1} parent=1 // loop_pre_header
      _
    $region3: #{bilstm_crf_device.1} parent=1 // loop_header
      %s11 = sphi 0, %s15
      %p12 = scmp.ge.s32.totalorder %s11, 4
      %s21 = sphi 0, %s23
      %s24 = sphi 0, %s21
      %s25 = sphi 0, %s24
      %s41 = sphi 0, %s25
      %s45 = sphi 0, %s45
      %s47 = sphi 0, %s45
      %s48 = sphi 0, %s47
      %s62 = sphi 0, %s48
      %s68 = sphi 0, %s70
      %s71 = sphi 0, %s68
      %s72 = sphi 0, %s71
      %s88 = sphi 0, %s72
    $region4: #{bilstm_crf_device.1} parent=1 // loop_header_branch
      %14 = sbr.rel (%p12) target = $region8
    $region5: #{bilstm_crf_device.1} parent=1 // loop_body
      %s16 = ssub.s32 %s11, 1
      %s17 = ssub.s32 %s11, 2
      %s18 = sadd.s32 %s11, 1
      %s19 = ssub.s32 %s11, %s18
      %p20 = scmp.eq.s32.totalorder %s19, 0
      %s22 = sadd.s32 %s21, 1
      %s23 = scalar_select %p20, %s21, %s22
      %p26 = pneg %p20
      %p27 = scmp.eq.s32.totalorder %s11, 1
      %p28 = por %p26, %p27
      %p29 = scmp.ne.s32.totalorder %s21, %s24
      %p30 = scmp.eq.s32.totalorder %s11, 0
      %p31 = por %p29, %p30
      %p32 = scmp.ne.s32.totalorder %s21, %s24
      %p33 = scmp.eq.s32.totalorder %s16, 1
      %p34 = por %p32, %p33
      %p35 = scmp.ne.s32.totalorder %s24, %s25
      %p36 = scmp.eq.s32.totalorder %s16, 0
      %p37 = por %p35, %p36
      %p38 = scmp.ne.s32.totalorder %s24, %s25
      %p39 = scmp.eq.s32.totalorder %s17, 1
      %p40 = por %p38, %p39
      %p42 = scmp.ne.s32.totalorder %s25, %s41
      %p43 = scmp.eq.s32.totalorder %s17, 0
      %p44 = por %p42, %p43
      %s46 = sadd.s32 %s45, 1
      %p49 = scmp.eq.s32.totalorder %s11, 1
      %p50 = scmp.ne.s32.totalorder %s45, %s47
      %p51 = scmp.eq.s32.totalorder %s11, 0
      %p52 = por %p50, %p51
      %p53 = scmp.ne.s32.totalorder %s45, %s47
      %p54 = scmp.eq.s32.totalorder %s16, 1
      %p55 = por %p53, %p54
      %p56 = scmp.ne.s32.totalorder %s47, %s48
      %p57 = scmp.eq.s32.totalorder %s16, 0
      %p58 = por %p56, %p57
      %p59 = scmp.ne.s32.totalorder %s47, %s48
      %p60 = scmp.eq.s32.totalorder %s17, 1
      %p61 = por %p59, %p60
      %p63 = scmp.ne.s32.totalorder %s48, %s62
      %p64 = scmp.eq.s32.totalorder %s17, 0
      %p65 = por %p63, %p64
      %s66 = ssub.s32 %s11, %s18
      %p67 = scmp.eq.s32.totalorder %s66, 0
      %s69 = sadd.s32 %s68, 1
      %s70 = scalar_select %p67, %s68, %s69
      %p73 = pneg %p67
      %p74 = scmp.eq.s32.totalorder %s11, 1
      %p75 = por %p73, %p74
      %p76 = scmp.ne.s32.totalorder %s68, %s71
      %p77 = scmp.eq.s32.totalorder %s11, 0
      %p78 = por %p76, %p77
      %p79 = scmp.ne.s32.totalorder %s68, %s71
      %p80 = scmp.eq.s32.totalorder %s16, 1
      %p81 = por %p79, %p80
      %p82 = scmp.ne.s32.totalorder %s71, %s72
      %p83 = scmp.eq.s32.totalorder %s16, 0
      %p84 = por %p82, %p83
      %p85 = scmp.ne.s32.totalorder %s71, %s72
      %p86 = scmp.eq.s32.totalorder %s17, 1
      %p87 = por %p85, %p86
      %p89 = scmp.ne.s32.totalorder %s72, %s88
      %p90 = scmp.eq.s32.totalorder %s17, 0
      %p91 = por %p89, %p90
      %p92 = scmp.le.s32.totalorder 1, %s11
      %p93 = scmp.lt.s32.totalorder %s11, 3
      %p94 = pnand %p92, %p93
      %p95 = pneg %p94
      // Predicated region
      $region9: #{bilstm_crf_device.1} parent=5 // pred_check
        _
      $region10: #{bilstm_crf_device.1} parent=5 // pred_check_branch
        %97 = sbr.rel (%p94) target = $region12
      $region11: #{bilstm_crf_device.1} parent=5 // pred_region
        %s98 = ssub.s32 %s11, 1
        // Predicated region
        $region13: #{bilstm_crf_device.1} parent=11 // pred_check
          %p99 = pneg %p58
        $region14: #{bilstm_crf_device.1} parent=11 // pred_check_branch
          %101 = sbr.rel (%p99) target = $region16
        $region15: #{bilstm_crf_device.1} parent=11 // pred_region
          _
        $region16: #{bilstm_crf_device.1} parent=11 // pred_fallthru
          _
      $region12: #{bilstm_crf_device.1} parent=5 // pred_fallthru
        _
      %p102 = scmp.lt.s32.totalorder %s11, 2
      // Predicated region
      $region17: #{bilstm_crf_device.1} parent=5 // pred_check
        %p103 = pneg %p102
      $region18: #{bilstm_crf_device.1} parent=5 // pred_check_branch
        %105 = sbr.rel (%p103) target = $region20
      $region19: #{bilstm_crf_device.1} parent=5 // pred_region
        // Predicated region
        $region21: #{bilstm_crf_device.1} parent=19 // pred_check
          %p106 = pneg %p31
        $region22: #{bilstm_crf_device.1} parent=19 // pred_check_branch
          %108 = sbr.rel (%p106) target = $region24
        $region23: #{bilstm_crf_device.1} parent=19 // pred_region
          %p109 = scmp.lt.s32.totalorder %s11, 1
          %s110 = scalar_select %p109, %s11, 1
          %s111 = smul.addr %s110, 8
          %s112 = scalar_lea.vmem %s0, %s111
        $region24: #{bilstm_crf_device.1} parent=19 // pred_fallthru
          _
      $region20: #{bilstm_crf_device.1} parent=5 // pred_fallthru
        _
      %p113 = scmp.le.s32.totalorder 1, %s11
      %p114 = scmp.lt.s32.totalorder %s11, 3
      %p115 = pnand %p113, %p114
      %p116 = pneg %p115
      // Predicated region
      $region25: #{bilstm_crf_device.1} parent=5 // pred_check
        _
      $region26: #{bilstm_crf_device.1} parent=5 // pred_check_branch
        %118 = sbr.rel (%p115) target = $region28
      $region27: #{bilstm_crf_device.1} parent=5 // pred_region
        %s119 = ssub.s32 %s11, 1
        %p120 = scmp.lt.s32.totalorder %s16, 1
        %s121 = scalar_select %p120, %s16, 1
        %s122 = smul.addr %s121, 8
        %s123 = scalar_lea.vmem %s0, %s122
        %p124 = pneg %p37
        %p125 = pneg %p34
        %p126 = pneg %p58
        %p127 = pneg %p55
        %p128 = pneg %p84
        %p129 = pneg %p81
        %s130 = sand.u32 %s71, 1
        %s131 = scalar_lea.sflag [#allocation8], %s130
        %s132 = sand.u32 %s71, 1
        %s133 = smul.addr %s132, 16
        %s134 = scalar_lea.vmem [#allocation7], %s133
        %p135 = scmp.lt.s32.totalorder %s16, 1
        %s136 = scalar_select %p135, %s16, 1
        %s137 = smul.addr %s136, 8
        %s138 = scalar_lea.vmem %s0, %s137
        %s139 = smul.u32 2, %s16
        %v140 = vld [vmem:[%s138] sm:$0xff]
        %v141 = vlaneseq
        %v142 = vand.u32 %v141, 127
        %143 = vset.pattern.permute.xlu0 0
        %144 = vperm.xlu0 %143, %v140
        %v145 = vpop.permute.xlu0 %144
        %vm146 = vcmp.eq.s32.totalorder %v145, %v142
        %v147 = vsel %vm146, 1, 0
        %v148 = vcvt.s32.f32 %v147
        %v149 = vld [vmem:[%s1] sm:$0xff]
        %v150 = vld [vmem:[%s1 + $0x8] sm:$0xff]
        %v151 = vld [vmem:[%s1 + $0x10] sm:$0xff]
        %vm152 = vcmask 195584
        %v154 = vsel %vm152, %v148, 0
        %156 = vmatpush.msra.mxu0 0.0
        %157 = vmatpush.msra.mxu0 0.0
        %158 = vmatpush.msra.mxu0 0.0
        %159 = vmatpush.msra.mxu0 0.0
        %160 = vmatpush.msra.mxu0 0.0
        %161 = vmatpush.msra.mxu0 0.0
        %162 = vmatpush.msra.mxu0 0.0
        %163 = vmatpush.msra.mxu0 0.0
        %164 = vmatpush.msra.mxu0 0.0
        %165 = vmatpush.msra.mxu0 0.0
        %166 = vmatpush.msra.mxu0 0.0
        %167 = vmatpush.msra.mxu0 0.0
        %168 = vmatpush.msra.mxu0 0.0
        %169 = vmatpush.msra.mxu0 %v151
        %170 = vmatpush.msra.mxu0 %v150
        %171 = vmatpush.msra.mxu0 %v149
        %172 = vmatmul.f32.gmra.mxu0 %v154
        %v173 = vpop.f32.mrf.mxu0
        %v174 = vadd.f32 0.0, %v173
        %175 = vdwg.mxu0
        %vm176 = vcmask 523264
        %177 = vst.msk [vmem:[#allocation2] sm:$0xff] %vm176, %v174
        %179 = vrot.lane.b32.xlu0 %v174, 64
        %v180 = vpop.permute.xlu0 %179
        %182 = vst.msk [vmem:[#allocation3] sm:$0xff] %vm176, %v180
        %v183 = vld [vmem:[%s1 + $0x18] sm:$0xff]
        %v184 = vld [vmem:[%s1 + $0x20] sm:$0xff]
        %v185 = vld [vmem:[%s1 + $0x60] sm:$0x3]
        %v186 = vld [vmem:[%s1 + $0x68] sm:$0x3]
        %v187 = vlaneseq
        %v188 = vshrl.u32 %v187, 7
        %vm189 = vcmp.ge.s32.totalorder %v142, 32
        %vm190 = vcmp.lt.s32.totalorder %v142, 48
        %vm191 = vmand %vm189, %vm190
        %v192 = vsel %vm191, 1.0, 0.5
        %v193 = vsel %vm191, 0.0, 0.5
        %vm194 = vcmp.eq.s32.totalorder %v188, 0
        %v195 = vld [vmem:[#allocation2] sm:$0x1]
        %v196 = vld [vmem:[#allocation3 + $0x7] sm:$0x1]
        %v197 = vperm.slane %v195, 0
        %v198 = vperm.slane %v196, 0
        %v199 = vsel %vm194, %v197, %v198
        %vm200 = vcmask 130048
        %v202 = vsel %vm200, %v185, 0
        %204 = vmatpush.msra.mxu0 0.0
        %205 = vmatpush.msra.mxu0 0.0
        %206 = vmatpush.msra.mxu0 0.0
        %207 = vmatpush.msra.mxu0 0.0
        %208 = vmatpush.msra.mxu0 0.0
        %209 = vmatpush.msra.mxu0 0.0
        %210 = vmatpush.msra.mxu0 0.0
        %211 = vmatpush.msra.mxu0 0.0
        %212 = vmatpush.msra.mxu0 0.0
        %213 = vmatpush.msra.mxu0 0.0
        %214 = vmatpush.msra.mxu0 0.0
        %215 = vmatpush.msra.mxu0 0.0
        %216 = vmatpush.msra.mxu0 0.0
        %217 = vmatpush.msra.mxu0 0.0
        %218 = vmatpush.msra.mxu0 %v184
        %219 = vmatpush.msra.mxu0 %v183
        %220 = vmatmul.f32.gmra.mxu0 %v202
        %v221 = vpop.f32.mrf.mxu0
        %v222 = vadd.f32 0.0, %v221
        %223 = vdwg.mxu0
        %226 = vrot.lane.b32.xlu0 %v183, 64
        %v227 = vpop.permute.xlu0 %226
        %228 = vrot.lane.b32.xlu0 %v184, 64
        %v229 = vpop.permute.xlu0 %228
        %232 = vmatpush.msra.mxu0 0.0
        %233 = vmatpush.msra.mxu0 0.0
        %234 = vmatpush.msra.mxu0 0.0
        %235 = vmatpush.msra.mxu0 0.0
        %236 = vmatpush.msra.mxu0 0.0
        %237 = vmatpush.msra.mxu0 0.0
        %238 = vmatpush.msra.mxu0 0.0
        %239 = vmatpush.msra.mxu0 0.0
        %240 = vmatpush.msra.mxu0 0.0
        %241 = vmatpush.msra.mxu0 0.0
        %242 = vmatpush.msra.mxu0 0.0
        %243 = vmatpush.msra.mxu0 0.0
        %244 = vmatpush.msra.mxu0 0.0
        %245 = vmatpush.msra.mxu0 0.0
        %246 = vmatpush.msra.mxu0 %v229
        %247 = vmatpush.msra.mxu0 %v227
        %248 = vmatmul.f32.gmra.mxu0 %v202
        %v249 = vpop.f32.mrf.mxu0
        %v250 = vadd.f32 0.0, %v249
        %251 = vdwg.mxu0
        %v252 = vsel %vm194, %v222, %v250
        %v253 = vadd.f32 %v199, %v252
        %v254 = vtanh.pop %v253
        %v255 = vmul.f32 %v254, %v192
        %v256 = vadd.f32 %v255, %v193
        %258 = vrot.lane.b32.xlu0 %v186, 16
        %v259 = vpop.permute.xlu0 %258
        %v261 = vmul.f32 %v256, %v259
        %263 = vrot.lane.b32.xlu0 %v256, 96
        %v264 = vpop.permute.xlu0 %263
        %v266 = vmul.f32 %v256, %v264
        %268 = vrot.lane.b32.xlu0 %v266, 16
        %v269 = vpop.permute.xlu0 %268
        %v271 = vadd.f32 %v261, %v269
        %v272 = vtanh.pop %v271
        %274 = vrot.lane.b32.xlu0 %v272, 32
        %v275 = vpop.permute.xlu0 %274
        %v277 = vmul.f32 %v256, %v275
        %279 = vrot.lane.b32.xlu0 %v277, 80
        %v280 = vpop.permute.xlu0 %279
        %vm282 = vcmask 122880
        %283 = vst.msk [vmem:[#allocation4] sm:$0x1] %vm282, %v280
        %vm284 = vcmask 123905
        %285 = vst.msk [vmem:[#allocation5 + $0x6] sm:$0x2] %vm284, %v280
        %v286 = vld [vmem:[#allocation2 + $0x1] sm:$0x1]
        %v287 = vld [vmem:[#allocation3 + $0x6] sm:$0x1]
        %v288 = vperm.slane %v286, 0
        %v289 = vperm.slane %v287, 0
        %v290 = vsel %vm194, %v288, %v289
        %v291 = vsel %vm200, %v280, 0
        %293 = vmatpush.msra.mxu0 0.0
        %294 = vmatpush.msra.mxu0 0.0
        %295 = vmatpush.msra.mxu0 0.0
        %296 = vmatpush.msra.mxu0 0.0
        %297 = vmatpush.msra.mxu0 0.0
        %298 = vmatpush.msra.mxu0 0.0
        %299 = vmatpush.msra.mxu0 0.0
        %300 = vmatpush.msra.mxu0 0.0
        %301 = vmatpush.msra.mxu0 0.0
        %302 = vmatpush.msra.mxu0 0.0
        %303 = vmatpush.msra.mxu0 0.0
        %304 = vmatpush.msra.mxu0 0.0
        %305 = vmatpush.msra.mxu0 0.0
        %306 = vmatpush.msra.mxu0 0.0
        %307 = vmatpush.msra.mxu0 %v184
        %308 = vmatpush.msra.mxu0 %v183
        %309 = vmatmul.f32.gmra.mxu0 %v291
        %v310 = vpop.f32.mrf.mxu0
        %v311 = vadd.f32 0.0, %v310
        %312 = vdwg.mxu0
        %313 = vmatpush.msra.mxu0 0.0
        %314 = vmatpush.msra.mxu0 0.0
        %315 = vmatpush.msra.mxu0 0.0
        %316 = vmatpush.msra.mxu0 0.0
        %317 = vmatpush.msra.mxu0 0.0
        %318 = vmatpush.msra.mxu0 0.0
        %319 = vmatpush.msra.mxu0 0.0
        %320 = vmatpush.msra.mxu0 0.0
        %321 = vmatpush.msra.mxu0 0.0
        %322 = vmatpush.msra.mxu0 0.0
        %323 = vmatpush.msra.mxu0 0.0
        %324 = vmatpush.msra.mxu0 0.0
        %325 = vmatpush.msra.mxu0 0.0
        %326 = vmatpush.msra.mxu0 0.0
        %327 = vmatpush.msra.mxu0 %v229
        %328 = vmatpush.msra.mxu0 %v227
        %329 = vmatmul.f32.gmra.mxu0 %v291
        %v330 = vpop.f32.mrf.mxu0
        %v331 = vadd.f32 0.0, %v330
        %332 = vdwg.mxu0
        %v333 = vsel %vm194, %v311, %v331
        %v334 = vadd.f32 %v290, %v333
        %v335 = vtanh.pop %v334
        %v336 = vmul.f32 %v335, %v192
        %v337 = vadd.f32 %v336, %v193
        %v338 = vmul.f32 %v337, %v271
        %340 = vrot.lane.b32.xlu0 %v337, 96
        %v341 = vpop.permute.xlu0 %340
        %v343 = vmul.f32 %v337, %v341
        %345 = vrot.lane.b32.xlu0 %v343, 16
        %v346 = vpop.permute.xlu0 %345
        %v348 = vadd.f32 %v338, %v346
        %v349 = vtanh.pop %v348
        %351 = vrot.lane.b32.xlu0 %v349, 32
        %v352 = vpop.permute.xlu0 %351
        %v354 = vmul.f32 %v337, %v352
        %356 = vrot.lane.b32.xlu0 %v354, 80
        %v357 = vpop.permute.xlu0 %356
        %359 = vst.msk [vmem:[#allocation4 + $0x1] sm:$0x1] %vm282, %v357
        %360 = vst.msk [vmem:[#allocation5 + $0x5] sm:$0x2] %vm284, %v357
        %v361 = vld [vmem:[#allocation2 + $0x2] sm:$0x1]
        %v362 = vld [vmem:[#allocation3 + $0x5] sm:$0x1]
        %v363 = vperm.slane %v361, 0
        %v364 = vperm.slane %v362, 0
        %v365 = vsel %vm194, %v363, %v364
        %v366 = vsel %vm200, %v357, 0
        %368 = vmatpush.msra.mxu0 0.0
        %369 = vmatpush.msra.mxu0 0.0
        %370 = vmatpush.msra.mxu0 0.0
        %371 = vmatpush.msra.mxu0 0.0
        %372 = vmatpush.msra.mxu0 0.0
        %373 = vmatpush.msra.mxu0 0.0
        %374 = vmatpush.msra.mxu0 0.0
        %375 = vmatpush.msra.mxu0 0.0
        %376 = vmatpush.msra.mxu0 0.0
        %377 = vmatpush.msra.mxu0 0.0
        %378 = vmatpush.msra.mxu0 0.0
        %379 = vmatpush.msra.mxu0 0.0
        %380 = vmatpush.msra.mxu0 0.0
        %381 = vmatpush.msra.mxu0 0.0
        %382 = vmatpush.msra.mxu0 %v184
        %383 = vmatpush.msra.mxu0 %v183
        %384 = vmatmul.f32.gmra.mxu0 %v366
        %v385 = vpop.f32.mrf.mxu0
        %v386 = vadd.f32 0.0, %v385
        %387 = vdwg.mxu0
        %388 = vmatpush.msra.mxu0 0.0
        %389 = vmatpush.msra.mxu0 0.0
        %390 = vmatpush.msra.mxu0 0.0
        %391 = vmatpush.msra.mxu0 0.0
        %392 = vmatpush.msra.mxu0 0.0
        %393 = vmatpush.msra.mxu0 0.0
        %394 = vmatpush.msra.mxu0 0.0
        %395 = vmatpush.msra.mxu0 0.0
        %396 = vmatpush.msra.mxu0 0.0
        %397 = vmatpush.msra.mxu0 0.0
        %398 = vmatpush.msra.mxu0 0.0
        %399 = vmatpush.msra.mxu0 0.0
        %400 = vmatpush.msra.mxu0 0.0
        %401 = vmatpush.msra.mxu0 0.0
        %402 = vmatpush.msra.mxu0 %v229
        %403 = vmatpush.msra.mxu0 %v227
        %404 = vmatmul.f32.gmra.mxu0 %v366
        %v405 = vpop.f32.mrf.mxu0
        %v406 = vadd.f32 0.0, %v405
        %407 = vdwg.mxu0
        %v408 = vsel %vm194, %v386, %v406
        %v409 = vadd.f32 %v365, %v408
        %v410 = vtanh.pop %v409
        %v411 = vmul.f32 %v410, %v192
        %v412 = vadd.f32 %v411, %v193
        %v413 = vmul.f32 %v412, %v348
        %415 = vrot.lane.b32.xlu0 %v412, 96
        %v416 = vpop.permute.xlu0 %415
        %v418 = vmul.f32 %v412, %v416
        %420 = vrot.lane.b32.xlu0 %v418, 16
        %v421 = vpop.permute.xlu0 %420
        %v423 = vadd.f32 %v413, %v421
        %v424 = vtanh.pop %v423
        %426 = vrot.lane.b32.xlu0 %v424, 32
        %v427 = vpop.permute.xlu0 %426
        %v429 = vmul.f32 %v412, %v427
        %431 = vrot.lane.b32.xlu0 %v429, 80
        %v432 = vpop.permute.xlu0 %431
        %434 = vst.msk [vmem:[#allocation4 + $0x2] sm:$0x1] %vm282, %v432
        %435 = vst.msk [vmem:[#allocation5 + $0x4] sm:$0x2] %vm284, %v432
        %v436 = vld [vmem:[#allocation2 + $0x3] sm:$0x1]
        %v437 = vld [vmem:[#allocation3 + $0x4] sm:$0x1]
        %v438 = vperm.slane %v436, 0
        %v439 = vperm.slane %v437, 0
        %v440 = vsel %vm194, %v438, %v439
        %v441 = vsel %vm200, %v432, 0
        %443 = vmatpush.msra.mxu0 0.0
        %444 = vmatpush.msra.mxu0 0.0
        %445 = vmatpush.msra.mxu0 0.0
        %446 = vmatpush.msra.mxu0 0.0
        %447 = vmatpush.msra.mxu0 0.0
        %448 = vmatpush.msra.mxu0 0.0
        %449 = vmatpush.msra.mxu0 0.0
        %450 = vmatpush.msra.mxu0 0.0
        %451 = vmatpush.msra.mxu0 0.0
        %452 = vmatpush.msra.mxu0 0.0
        %453 = vmatpush.msra.mxu0 0.0
        %454 = vmatpush.msra.mxu0 0.0
        %455 = vmatpush.msra.mxu0 0.0
        %456 = vmatpush.msra.mxu0 0.0
        %457 = vmatpush.msra.mxu0 %v184
        %458 = vmatpush.msra.mxu0 %v183
        %459 = vmatmul.f32.gmra.mxu0 %v441
        %v460 = vpop.f32.mrf.mxu0
        %v461 = vadd.f32 0.0, %v460
        %462 = vdwg.mxu0
        %463 = vmatpush.msra.mxu0 0.0
        %464 = vmatpush.msra.mxu0 0.0
        %465 = vmatpush.msra.mxu0 0.0
        %466 = vmatpush.msra.mxu0 0.0
        %467 = vmatpush.msra.mxu0 0.0
        %468 = vmatpush.msra.mxu0 0.0
        %469 = vmatpush.msra.mxu0 0.0
        %470 = vmatpush.msra.mxu0 0.0
        %471 = vmatpush.msra.mxu0 0.0
        %472 = vmatpush.msra.mxu0 0.0
        %473 = vmatpush.msra.mxu0 0.0
        %474 = vmatpush.msra.mxu0 0.0
        %475 = vmatpush.msra.mxu0 0.0
        %476 = vmatpush.msra.mxu0 0.0
        %477 = vmatpush.msra.mxu0 %v229
        %478 = vmatpush.msra.mxu0 %v227
        %479 = vmatmul.f32.gmra.mxu0 %v441
        %v480 = vpop.f32.mrf.mxu0
        %v481 = vadd.f32 0.0, %v480
        %482 = vdwg.mxu0
        %v483 = vsel %vm194, %v461, %v481
        %v484 = vadd.f32 %v440, %v483
        %v485 = vtanh.pop %v484
        %v486 = vmul.f32 %v485, %v192
        %v487 = vadd.f32 %v486, %v193
        %v488 = vmul.f32 %v487, %v423
        %490 = vrot.lane.b32.xlu0 %v487, 96
        %v491 = vpop.permute.xlu0 %490
        %v493 = vmul.f32 %v487, %v491
        %495 = vrot.lane.b32.xlu0 %v493, 16
        %v496 = vpop.permute.xlu0 %495
        %v498 = vadd.f32 %v488, %v496
        %v499 = vtanh.pop %v498
        %501 = vrot.lane.b32.xlu0 %v499, 32
        %v502 = vpop.permute.xlu0 %501
        %v504 = vmul.f32 %v487, %v502
        %506 = vrot.lane.b32.xlu0 %v504, 80
        %v507 = vpop.permute.xlu0 %506
        %509 = vst.msk [vmem:[#allocation4 + $0x3] sm:$0x1] %vm282, %v507
        %510 = vst.msk [vmem:[#allocation5 + $0x3] sm:$0x2] %vm284, %v507
        %v511 = vld [vmem:[#allocation2 + $0x4] sm:$0x1]
        %v512 = vld [vmem:[#allocation3 + $0x3] sm:$0x1]
        %v513 = vperm.slane %v511, 0
        %v514 = vperm.slane %v512, 0
        %v515 = vsel %vm194, %v513, %v514
        %v516 = vsel %vm200, %v507, 0
        %518 = vmatpush.msra.mxu0 0.0
        %519 = vmatpush.msra.mxu0 0.0
        %520 = vmatpush.msra.mxu0 0.0
        %521 = vmatpush.msra.mxu0 0.0
        %522 = vmatpush.msra.mxu0 0.0
        %523 = vmatpush.msra.mxu0 0.0
        %524 = vmatpush.msra.mxu0 0.0
        %525 = vmatpush.msra.mxu0 0.0
        %526 = vmatpush.msra.mxu0 0.0
        %527 = vmatpush.msra.mxu0 0.0
        %528 = vmatpush.msra.mxu0 0.0
        %529 = vmatpush.msra.mxu0 0.0
        %530 = vmatpush.msra.mxu0 0.0
        %531 = vmatpush.msra.mxu0 0.0
        %532 = vmatpush.msra.mxu0 %v184
        %533 = vmatpush.msra.mxu0 %v183
        %534 = vmatmul.f32.gmra.mxu0 %v516
        %v535 = vpop.f32.mrf.mxu0
        %v536 = vadd.f32 0.0, %v535
        %537 = vdwg.mxu0
        %538 = vmatpush.msra.mxu0 0.0
        %539 = vmatpush.msra.mxu0 0.0
        %540 = vmatpush.msra.mxu0 0.0
        %541 = vmatpush.msra.mxu0 0.0
        %542 = vmatpush.msra.mxu0 0.0
        %543 = vmatpush.msra.mxu0 0.0
        %544 = vmatpush.msra.mxu0 0.0
        %545 = vmatpush.msra.mxu0 0.0
        %546 = vmatpush.msra.mxu0 0.0
        %547 = vmatpush.msra.mxu0 0.0
        %548 = vmatpush.msra.mxu0 0.0
        %549 = vmatpush.msra.mxu0 0.0
        %550 = vmatpush.msra.mxu0 0.0
        %551 = vmatpush.msra.mxu0 0.0
        %552 = vmatpush.msra.mxu0 %v229
        %553 = vmatpush.msra.mxu0 %v227
        %554 = vmatmul.f32.gmra.mxu0 %v516
        %v555 = vpop.f32.mrf.mxu0
        %v556 = vadd.f32 0.0, %v555
        %557 = vdwg.mxu0
        %v558 = vsel %vm194, %v536, %v556
        %v559 = vadd.f32 %v515, %v558
        %v560 = vtanh.pop %v559
        %v561 = vmul.f32 %v560, %v192
        %v562 = vadd.f32 %v561, %v193
        %v563 = vmul.f32 %v562, %v498
        %565 = vrot.lane.b32.xlu0 %v562, 96
        %v566 = vpop.permute.xlu0 %565
        %v568 = vmul.f32 %v562, %v566
        %570 = vrot.lane.b32.xlu0 %v568, 16
        %v571 = vpop.permute.xlu0 %570
        %v573 = vadd.f32 %v563, %v571
        %v574 = vtanh.pop %v573
        %576 = vrot.lane.b32.xlu0 %v574, 32
        %v577 = vpop.permute.xlu0 %576
        %v579 = vmul.f32 %v562, %v577
        %581 = vrot.lane.b32.xlu0 %v579, 80
        %v582 = vpop.permute.xlu0 %581
        %584 = vst.msk [vmem:[#allocation4 + $0x4] sm:$0x1] %vm282, %v582
        %585 = vst.msk [vmem:[#allocation5 + $0x2] sm:$0x2] %vm284, %v582
        %v586 = vld [vmem:[#allocation2 + $0x5] sm:$0x1]
        %v587 = vld [vmem:[#allocation3 + $0x2] sm:$0x1]
        %v588 = vperm.slane %v586, 0
        %v589 = vperm.slane %v587, 0
        %v590 = vsel %vm194, %v588, %v589
        %v591 = vsel %vm200, %v582, 0
        %593 = vmatpush.msra.mxu0 0.0
        %594 = vmatpush.msra.mxu0 0.0
        %595 = vmatpush.msra.mxu0 0.0
        %596 = vmatpush.msra.mxu0 0.0
        %597 = vmatpush.msra.mxu0 0.0
        %598 = vmatpush.msra.mxu0 0.0
        %599 = vmatpush.msra.mxu0 0.0
        %600 = vmatpush.msra.mxu0 0.0
        %601 = vmatpush.msra.mxu0 0.0
        %602 = vmatpush.msra.mxu0 0.0
        %603 = vmatpush.msra.mxu0 0.0
        %604 = vmatpush.msra.mxu0 0.0
        %605 = vmatpush.msra.mxu0 0.0
        %606 = vmatpush.msra.mxu0 0.0
        %607 = vmatpush.msra.mxu0 %v184
        %608 = vmatpush.msra.mxu0 %v183
        %609 = vmatmul.f32.gmra.mxu0 %v591
        %v610 = vpop.f32.mrf.mxu0
        %v611 = vadd.f32 0.0, %v610
        %612 = vdwg.mxu0
        %613 = vmatpush.msra.mxu0 0.0
        %614 = vmatpush.msra.mxu0 0.0
        %615 = vmatpush.msra.mxu0 0.0
        %616 = vmatpush.msra.mxu0 0.0
        %617 = vmatpush.msra.mxu0 0.0
        %618 = vmatpush.msra.mxu0 0.0
        %619 = vmatpush.msra.mxu0 0.0
        %620 = vmatpush.msra.mxu0 0.0
        %621 = vmatpush.msra.mxu0 0.0
        %622 = vmatpush.msra.mxu0 0.0
        %623 = vmatpush.msra.mxu0 0.0
        %624 = vmatpush.msra.mxu0 0.0
        %625 = vmatpush.msra.mxu0 0.0
        %626 = vmatpush.msra.mxu0 0.0
        %627 = vmatpush.msra.mxu0 %v229
        %628 = vmatpush.msra.mxu0 %v227
        %629 = vmatmul.f32.gmra.mxu0 %v591
        %v630 = vpop.f32.mrf.mxu0
        %v631 = vadd.f32 0.0, %v630
        %632 = vdwg.mxu0
        %v633 = vsel %vm194, %v611, %v631
        %v634 = vadd.f32 %v590, %v633
        %v635 = vtanh.pop %v634
        %v636 = vmul.f32 %v635, %v192
        %v637 = vadd.f32 %v636, %v193
        %v638 = vmul.f32 %v637, %v573
        %640 = vrot.lane.b32.xlu0 %v637, 96
        %v641 = vpop.permute.xlu0 %640
        %v643 = vmul.f32 %v637, %v641
        %645 = vrot.lane.b32.xlu0 %v643, 16
        %v646 = vpop.permute.xlu0 %645
        %v648 = vadd.f32 %v638, %v646
        %v649 = vtanh.pop %v648
        %651 = vrot.lane.b32.xlu0 %v649, 32
        %v652 = vpop.permute.xlu0 %651
        %v654 = vmul.f32 %v637, %v652
        %656 = vrot.lane.b32.xlu0 %v654, 80
        %v657 = vpop.permute.xlu0 %656
        %659 = vst.msk [vmem:[#allocation4 + $0x5] sm:$0x1] %vm282, %v657
        %660 = vst.msk [vmem:[#allocation5 + $0x1] sm:$0x2] %vm284, %v657
        %v661 = vld [vmem:[#allocation2 + $0x6] sm:$0x1]
        %v662 = vld [vmem:[#allocation3 + $0x1] sm:$0x1]
        %v663 = vperm.slane %v661, 0
        %v664 = vperm.slane %v662, 0
        %v665 = vsel %vm194, %v663, %v664
        %v666 = vsel %vm200, %v657, 0
        %668 = vmatpush.msra.mxu0 0.0
        %669 = vmatpush.msra.mxu0 0.0
        %670 = vmatpush.msra.mxu0 0.0
        %671 = vmatpush.msra.mxu0 0.0
        %672 = vmatpush.msra.mxu0 0.0
        %673 = vmatpush.msra.mxu0 0.0
        %674 = vmatpush.msra.mxu0 0.0
        %675 = vmatpush.msra.mxu0 0.0
        %676 = vmatpush.msra.mxu0 0.0
        %677 = vmatpush.msra.mxu0 0.0
        %678 = vmatpush.msra.mxu0 0.0
        %679 = vmatpush.msra.mxu0 0.0
        %680 = vmatpush.msra.mxu0 0.0
        %681 = vmatpush.msra.mxu0 0.0
        %682 = vmatpush.msra.mxu0 %v184
        %683 = vmatpush.msra.mxu0 %v183
        %684 = vmatmul.f32.gmra.mxu0 %v666
        %v685 = vpop.f32.mrf.mxu0
        %v686 = vadd.f32 0.0, %v685
        %687 = vdwg.mxu0
        %688 = vmatpush.msra.mxu0 0.0
        %689 = vmatpush.msra.mxu0 0.0
        %690 = vmatpush.msra.mxu0 0.0
        %691 = vmatpush.msra.mxu0 0.0
        %692 = vmatpush.msra.mxu0 0.0
        %693 = vmatpush.msra.mxu0 0.0
        %694 = vmatpush.msra.mxu0 0.0
        %695 = vmatpush.msra.mxu0 0.0
        %696 = vmatpush.msra.mxu0 0.0
        %697 = vmatpush.msra.mxu0 0.0
        %698 = vmatpush.msra.mxu0 0.0
        %699 = vmatpush.msra.mxu0 0.0
        %700 = vmatpush.msra.mxu0 0.0
        %701 = vmatpush.msra.mxu0 0.0
        %702 = vmatpush.msra.mxu0 %v229
        %703 = vmatpush.msra.mxu0 %v227
        %704 = vmatmul.f32.gmra.mxu0 %v666
        %v705 = vpop.f32.mrf.mxu0
        %v706 = vadd.f32 0.0, %v705
        %707 = vdwg.mxu0
        %v708 = vsel %vm194, %v686, %v706
        %v709 = vadd.f32 %v665, %v708
        %v710 = vtanh.pop %v709
        %v711 = vmul.f32 %v710, %v192
        %v712 = vadd.f32 %v711, %v193
        %v713 = vmul.f32 %v712, %v648
        %715 = vrot.lane.b32.xlu0 %v712, 96
        %v716 = vpop.permute.xlu0 %715
        %v718 = vmul.f32 %v712, %v716
        %720 = vrot.lane.b32.xlu0 %v718, 16
        %v721 = vpop.permute.xlu0 %720
        %v723 = vadd.f32 %v713, %v721
        %v724 = vtanh.pop %v723
        %726 = vrot.lane.b32.xlu0 %v724, 32
        %v727 = vpop.permute.xlu0 %726
        %v729 = vmul.f32 %v712, %v727
        %731 = vrot.lane.b32.xlu0 %v729, 80
        %v732 = vpop.permute.xlu0 %731
        %734 = vst.msk [vmem:[#allocation4 + $0x6] sm:$0x1] %vm282, %v732
        %735 = vst.msk [vmem:[#allocation5] sm:$0x2] %vm284, %v732
        %v736 = vld [vmem:[#allocation2 + $0x7] sm:$0x1]
        %v737 = vld [vmem:[#allocation3] sm:$0x1]
        %v738 = vperm.slane %v736, 0
        %v739 = vperm.slane %v737, 0
        %v740 = vsel %vm194, %v738, %v739
        %v741 = vsel %vm200, %v732, 0
        %743 = vmatpush.msra.mxu0 0.0
        %744 = vmatpush.msra.mxu0 0.0
        %745 = vmatpush.msra.mxu0 0.0
        %746 = vmatpush.msra.mxu0 0.0
        %747 = vmatpush.msra.mxu0 0.0
        %748 = vmatpush.msra.mxu0 0.0
        %749 = vmatpush.msra.mxu0 0.0
        %750 = vmatpush.msra.mxu0 0.0
        %751 = vmatpush.msra.mxu0 0.0
        %752 = vmatpush.msra.mxu0 0.0
        %753 = vmatpush.msra.mxu0 0.0
        %754 = vmatpush.msra.mxu0 0.0
        %755 = vmatpush.msra.mxu0 0.0
        %756 = vmatpush.msra.mxu0 0.0
        %757 = vmatpush.msra.mxu0 %v184
        %758 = vmatpush.msra.mxu0 %v183
        %759 = vmatmul.f32.gmra.mxu0 %v741
        %v760 = vpop.f32.mrf.mxu0
        %v761 = vadd.f32 0.0, %v760
        %762 = vdwg.mxu0
        %763 = vmatpush.msra.mxu0 0.0
        %764 = vmatpush.msra.mxu0 0.0
        %765 = vmatpush.msra.mxu0 0.0
        %766 = vmatpush.msra.mxu0 0.0
        %767 = vmatpush.msra.mxu0 0.0
        %768 = vmatpush.msra.mxu0 0.0
        %769 = vmatpush.msra.mxu0 0.0
        %770 = vmatpush.msra.mxu0 0.0
        %771 = vmatpush.msra.mxu0 0.0
        %772 = vmatpush.msra.mxu0 0.0
        %773 = vmatpush.msra.mxu0 0.0
        %774 = vmatpush.msra.mxu0 0.0
        %775 = vmatpush.msra.mxu0 0.0
        %776 = vmatpush.msra.mxu0 0.0
        %777 = vmatpush.msra.mxu0 %v229
        %778 = vmatpush.msra.mxu0 %v227
        %779 = vmatmul.f32.gmra.mxu0 %v741
        %v780 = vpop.f32.mrf.mxu0
        %v781 = vadd.f32 0.0, %v780
        %782 = vdwg.mxu0
        %v783 = vsel %vm194, %v761, %v781
        %v784 = vadd.f32 %v740, %v783
        %v785 = vtanh.pop %v784
        %v786 = vmul.f32 %v785, %v192
        %v787 = vadd.f32 %v786, %v193
        %v788 = vmul.f32 %v787, %v723
        %790 = vrot.lane.b32.xlu0 %v787, 96
        %v791 = vpop.permute.xlu0 %790
        %v793 = vmul.f32 %v787, %v791
        %795 = vrot.lane.b32.xlu0 %v793, 16
        %v796 = vpop.permute.xlu0 %795
        %v798 = vadd.f32 %v788, %v796
        %v799 = vtanh.pop %v798
        %801 = vrot.lane.b32.xlu0 %v799, 32
        %v802 = vpop.permute.xlu0 %801
        %v804 = vmul.f32 %v787, %v802
        %806 = vrot.lane.b32.xlu0 %v804, 80
        %v807 = vpop.permute.xlu0 %806
        %809 = vst.msk [vmem:[#allocation4 + $0x7] sm:$0x1] %vm282, %v807
        %810 = vst.msk [vmem:[#allocation5 - $0x1] sm:$0x2] %vm284, %v807
        %v811 = vld [vmem:[#allocation4] sm:$0xff]
        %v812 = vld [vmem:[%s1 + $0x28] sm:$0xff]
        %v813 = vld [vmem:[%s1 + $0x30] sm:$0xff]
        %v814 = vld [vmem:[#allocation5] sm:$0xff]
        %v815 = vld [vmem:[%s1 + $0x38] sm:$0xff]
        %v816 = vld [vmem:[%s1 + $0x40] sm:$0xff]
        %v818 = vsel %vm200, %v814, 0
        %820 = vmatpush.msra.mxu0 0.0
        %821 = vmatpush.msra.mxu0 0.0
        %822 = vmatpush.msra.mxu0 0.0
        %823 = vmatpush.msra.mxu0 0.0
        %824 = vmatpush.msra.mxu0 0.0
        %825 = vmatpush.msra.mxu0 0.0
        %826 = vmatpush.msra.mxu0 0.0
        %827 = vmatpush.msra.mxu0 0.0
        %828 = vmatpush.msra.mxu0 0.0
        %829 = vmatpush.msra.mxu0 0.0
        %830 = vmatpush.msra.mxu0 0.0
        %831 = vmatpush.msra.mxu0 0.0
        %832 = vmatpush.msra.mxu0 0.0
        %833 = vmatpush.msra.mxu0 0.0
        %834 = vmatpush.msra.mxu0 %v816
        %835 = vmatpush.msra.mxu0 %v815
        %836 = vmatmul.f32.gmra.mxu0 %v818
        %v837 = vpop.f32.mrf.mxu0
        %v838 = vadd.f32 0.0, %v837
        %839 = vdwg.mxu0
        %v841 = vsel %vm200, %v811, 0
        %843 = vmatpush.msra.mxu0 0.0
        %844 = vmatpush.msra.mxu0 0.0
        %845 = vmatpush.msra.mxu0 0.0
        %846 = vmatpush.msra.mxu0 0.0
        %847 = vmatpush.msra.mxu0 0.0
        %848 = vmatpush.msra.mxu0 0.0
        %849 = vmatpush.msra.mxu0 0.0
        %850 = vmatpush.msra.mxu0 0.0
        %851 = vmatpush.msra.mxu0 0.0
        %852 = vmatpush.msra.mxu0 0.0
        %853 = vmatpush.msra.mxu0 0.0
        %854 = vmatpush.msra.mxu0 0.0
        %855 = vmatpush.msra.mxu0 0.0
        %856 = vmatpush.msra.mxu0 0.0
        %857 = vmatpush.msra.mxu0 %v813
        %858 = vmatpush.msra.mxu0 %v812
        %859 = vmatmul.f32.gmra.mxu0 %v841
        %v860 = vpop.f32.mrf.mxu0
        %v861 = vadd.f32 %v838, %v860
        %862 = vdwg.mxu0
        %v863 = vld [vmem:[%s1 + $0x48] sm:$0x1]
        %v864 = vperm.slane %v863, 0
        %v865 = vadd.f32 %v861, %v864
        %866 = vst [vmem:[%s134] sm:$0xff] %v865
        %v867 = vld [vmem:[%s1 + $0x50] sm:$0x3f]
        %v868 = vld [vmem:[%s1 + $0x58] sm:$0x1]
        %v869 = vcvt.s32.f32 %v188
        %vm870 = vcmp.eq.s32.totalorder %v188, %v142
        %v871 = vsel %vm870, 1, 0
        %v872 = vcvt.s32.f32 %v871
        %v873 = vcvt.s32.f32 %v142
        %vm874 = vcmp.eq.s32.totalorder %v142, 4
        %v875 = vsel %vm874, 0.0, -10000.0
        %v876 = vmul.f32 %v872, %v875
        %vm877 = vcmask 46080
        %v878 = vsel %vm877, %v876, 0.0
        %879 = vadd.xlane.f32.xlu0 %v878
        %v880 = vpop.xlane.xlu0 %879
        %v881 = vadd.f32 %v880, %v867
        %v882 = vsel %vm877, %v881, -inf
        %v883 = vrot.slane %v882, 4
        %v884 = vmax.f32 %v882, %v883
        %v885 = vrot.slane %v884, 2
        %v886 = vmax.f32 %v884, %v885
        %v887 = vrot.slane %v886, 1
        %v888 = vmax.f32 %v886, %v887
        %vm889 = vcmp.eq.f32.partialorder %v881, %v888
        %v890 = vsel %vm889, %v869, 6.0
        %v891 = vsel %vm877, %v890, inf
        %v892 = vrot.slane %v891, 4
        %v893 = vmin.f32 %v891, %v892
        %v894 = vrot.slane %v893, 2
        %v895 = vmin.f32 %v893, %v894
        %v896 = vrot.slane %v895, 1
        %v897 = vmin.f32 %v895, %v896
        %vm898 = vcmask 40960
        %899 = vst.msk [vmem:[#allocation6] sm:$0x1] %vm898, %v897
        %v900 = vld [vmem:[%s134] sm:$0x1]
        %v901 = vadd.f32 %v888, %v900
        %v902 = vperm.slane %v901, 0
        %v903 = vmul.f32 %v872, %v902
        %v904 = vsel %vm877, %v903, 0.0
        %905 = vadd.xlane.f32.xlu0 %v904
        %v906 = vpop.xlane.xlu0 %905
        %v907 = vadd.f32 %v906, %v867
        %v908 = vsel %vm877, %v907, -inf
        %v909 = vrot.slane %v908, 4
        %v910 = vmax.f32 %v908, %v909
        %v911 = vrot.slane %v910, 2
        %v912 = vmax.f32 %v910, %v911
        %v913 = vrot.slane %v912, 1
        %v914 = vmax.f32 %v912, %v913
        %vm915 = vcmp.eq.f32.partialorder %v907, %v914
        %v916 = vsel %vm915, %v869, 6.0
        %v917 = vsel %vm877, %v916, inf
        %v918 = vrot.slane %v917, 4
        %v919 = vmin.f32 %v917, %v918
        %v920 = vrot.slane %v919, 2
        %v921 = vmin.f32 %v919, %v920
        %v922 = vrot.slane %v921, 1
        %v923 = vmin.f32 %v921, %v922
        %924 = vst.msk [vmem:[#allocation6 + $0x1] sm:$0x1] %vm898, %v923
        %v925 = vld [vmem:[%s134 + $0x1] sm:$0x1]
        %v926 = vadd.f32 %v914, %v925
        %v927 = vperm.slane %v926, 0
        %v928 = vmul.f32 %v872, %v927
        %v929 = vsel %vm877, %v928, 0.0
        %930 = vadd.xlane.f32.xlu0 %v929
        %v931 = vpop.xlane.xlu0 %930
        %v932 = vadd.f32 %v931, %v867
        %v933 = vsel %vm877, %v932, -inf
        %v934 = vrot.slane %v933, 4
        %v935 = vmax.f32 %v933, %v934
        %v936 = vrot.slane %v935, 2
        %v937 = vmax.f32 %v935, %v936
        %v938 = vrot.slane %v937, 1
        %v939 = vmax.f32 %v937, %v938
        %vm940 = vcmp.eq.f32.partialorder %v932, %v939
        %v941 = vsel %vm940, %v869, 6.0
        %v942 = vsel %vm877, %v941, inf
        %v943 = vrot.slane %v942, 4
        %v944 = vmin.f32 %v942, %v943
        %v945 = vrot.slane %v944, 2
        %v946 = vmin.f32 %v944, %v945
        %v947 = vrot.slane %v946, 1
        %v948 = vmin.f32 %v946, %v947
        %949 = vst.msk [vmem:[#allocation6 + $0x2] sm:$0x1] %vm898, %v948
        %v950 = vld [vmem:[%s134 + $0x2] sm:$0x1]
        %v951 = vadd.f32 %v939, %v950
        %v952 = vperm.slane %v951, 0
        %v953 = vmul.f32 %v872, %v952
        %v954 = vsel %vm877, %v953, 0.0
        %955 = vadd.xlane.f32.xlu0 %v954
        %v956 = vpop.xlane.xlu0 %955
        %v957 = vadd.f32 %v956, %v867
        %v958 = vsel %vm877, %v957, -inf
        %v959 = vrot.slane %v958, 4
        %v960 = vmax.f32 %v958, %v959
        %v961 = vrot.slane %v960, 2
        %v962 = vmax.f32 %v960, %v961
        %v963 = vrot.slane %v962, 1
        %v964 = vmax.f32 %v962, %v963
        %vm965 = vcmp.eq.f32.partialorder %v957, %v964
        %v966 = vsel %vm965, %v869, 6.0
        %v967 = vsel %vm877, %v966, inf
        %v968 = vrot.slane %v967, 4
        %v969 = vmin.f32 %v967, %v968
        %v970 = vrot.slane %v969, 2
        %v971 = vmin.f32 %v969, %v970
        %v972 = vrot.slane %v971, 1
        %v973 = vmin.f32 %v971, %v972
        %974 = vst.msk [vmem:[#allocation6 + $0x3] sm:$0x1] %vm898, %v973
        %v975 = vld [vmem:[%s134 + $0x3] sm:$0x1]
        %v976 = vadd.f32 %v964, %v975
        %v977 = vperm.slane %v976, 0
        %v978 = vmul.f32 %v872, %v977
        %v979 = vsel %vm877, %v978, 0.0
        %980 = vadd.xlane.f32.xlu0 %v979
        %v981 = vpop.xlane.xlu0 %980
        %v982 = vadd.f32 %v981, %v867
        %v983 = vsel %vm877, %v982, -inf
        %v984 = vrot.slane %v983, 4
        %v985 = vmax.f32 %v983, %v984
        %v986 = vrot.slane %v985, 2
        %v987 = vmax.f32 %v985, %v986
        %v988 = vrot.slane %v987, 1
        %v989 = vmax.f32 %v987, %v988
        %vm990 = vcmp.eq.f32.partialorder %v982, %v989
        %v991 = vsel %vm990, %v869, 6.0
        %v992 = vsel %vm877, %v991, inf
        %v993 = vrot.slane %v992, 4
        %v994 = vmin.f32 %v992, %v993
        %v995 = vrot.slane %v994, 2
        %v996 = vmin.f32 %v994, %v995
        %v997 = vrot.slane %v996, 1
        %v998 = vmin.f32 %v996, %v997
        %999 = vst.msk [vmem:[#allocation6 + $0x4] sm:$0x1] %vm898, %v998
        %v1000 = vld [vmem:[%s134 + $0x4] sm:$0x1]
        %v1001 = vadd.f32 %v989, %v1000
        %v1002 = vperm.slane %v1001, 0
        %v1003 = vmul.f32 %v872, %v1002
        %v1004 = vsel %vm877, %v1003, 0.0
        %1005 = vadd.xlane.f32.xlu0 %v1004
        %v1006 = vpop.xlane.xlu0 %1005
        %v1007 = vadd.f32 %v1006, %v867
        %v1008 = vsel %vm877, %v1007, -inf
        %v1009 = vrot.slane %v1008, 4
        %v1010 = vmax.f32 %v1008, %v1009
        %v1011 = vrot.slane %v1010, 2
        %v1012 = vmax.f32 %v1010, %v1011
        %v1013 = vrot.slane %v1012, 1
        %v1014 = vmax.f32 %v1012, %v1013
        %vm1015 = vcmp.eq.f32.partialorder %v1007, %v1014
        %v1016 = vsel %vm1015, %v869, 6.0
        %v1017 = vsel %vm877, %v1016, inf
        %v1018 = vrot.slane %v1017, 4
        %v1019 = vmin.f32 %v1017, %v1018
        %v1020 = vrot.slane %v1019, 2
        %v1021 = vmin.f32 %v1019, %v1020
        %v1022 = vrot.slane %v1021, 1
        %v1023 = vmin.f32 %v1021, %v1022
        %1024 = vst.msk [vmem:[#allocation6 + $0x5] sm:$0x1] %vm898, %v1023
        %v1025 = vld [vmem:[%s134 + $0x5] sm:$0x1]
        %v1026 = vadd.f32 %v1014, %v1025
        %v1027 = vperm.slane %v1026, 0
        %v1028 = vmul.f32 %v872, %v1027
        %v1029 = vsel %vm877, %v1028, 0.0
        %1030 = vadd.xlane.f32.xlu0 %v1029
        %v1031 = vpop.xlane.xlu0 %1030
        %v1032 = vadd.f32 %v1031, %v867
        %v1033 = vsel %vm877, %v1032, -inf
        %v1034 = vrot.slane %v1033, 4
        %v1035 = vmax.f32 %v1033, %v1034
        %v1036 = vrot.slane %v1035, 2
        %v1037 = vmax.f32 %v1035, %v1036
        %v1038 = vrot.slane %v1037, 1
        %v1039 = vmax.f32 %v1037, %v1038
        %vm1040 = vcmp.eq.f32.partialorder %v1032, %v1039
        %v1041 = vsel %vm1040, %v869, 6.0
        %v1042 = vsel %vm877, %v1041, inf
        %v1043 = vrot.slane %v1042, 4
        %v1044 = vmin.f32 %v1042, %v1043
        %v1045 = vrot.slane %v1044, 2
        %v1046 = vmin.f32 %v1044, %v1045
        %v1047 = vrot.slane %v1046, 1
        %v1048 = vmin.f32 %v1046, %v1047
        %1049 = vst.msk [vmem:[#allocation6 + $0x6] sm:$0x1] %vm898, %v1048
        %v1050 = vld [vmem:[%s134 + $0x6] sm:$0x1]
        %v1051 = vadd.f32 %v1039, %v1050
        %v1052 = vperm.slane %v1051, 0
        %v1053 = vmul.f32 %v872, %v1052
        %v1054 = vsel %vm877, %v1053, 0.0
        %1055 = vadd.xlane.f32.xlu0 %v1054
        %v1056 = vpop.xlane.xlu0 %1055
        %v1057 = vadd.f32 %v1056, %v867
        %v1058 = vsel %vm877, %v1057, -inf
        %v1059 = vrot.slane %v1058, 4
        %v1060 = vmax.f32 %v1058, %v1059
        %v1061 = vrot.slane %v1060, 2
        %v1062 = vmax.f32 %v1060, %v1061
        %v1063 = vrot.slane %v1062, 1
        %v1064 = vmax.f32 %v1062, %v1063
        %vm1065 = vcmp.eq.f32.partialorder %v1057, %v1064
        %v1066 = vsel %vm1065, %v869, 6.0
        %v1067 = vsel %vm877, %v1066, inf
        %v1068 = vrot.slane %v1067, 4
        %v1069 = vmin.f32 %v1067, %v1068
        %v1070 = vrot.slane %v1069, 2
        %v1071 = vmin.f32 %v1069, %v1070
        %v1072 = vrot.slane %v1071, 1
        %v1073 = vmin.f32 %v1071, %v1072
        %1074 = vst.msk [vmem:[#allocation6 + $0x7] sm:$0x1] %vm898, %v1073
        %v1075 = vld [vmem:[%s134 + $0x7] sm:$0x1]
        %v1076 = vadd.f32 %v1064, %v1075
        %v1077 = vadd.f32 %v1076, %v868
        %v1078 = vsel %vm898, %v1077, -inf
        %1079 = vmax.xlane.f32.xlu0 %v1078
        %v1080 = vpop.xlane.xlu0 %1079
        %vm1081 = vcmp.eq.f32.partialorder %v1077, %v1080
        %v1082 = vsel %vm1081, %v873, 6.0
        %v1083 = vsel %vm898, %v1082, inf
        %1084 = vmin.xlane.f32.xlu0 %v1083
        %v1085 = vpop.xlane.xlu0 %1084
        %vm1086 = vcmp.eq.s32.totalorder %v142, 7
        %v1087 = vsel %vm1086, %v1085, 0.0
        %v1088 = vld [vmem:[#allocation6 + $0x7] sm:$0x1]
        %vm1089 = vcmp.eq.f32.partialorder %v873, %v1085
        %v1090 = vsel %vm1089, %v1088, 0.0
        %v1091 = vsel %vm898, %v1090, 0.0
        %1092 = vadd.xlane.f32.xlu0 %v1091
        %v1093 = vpop.xlane.xlu0 %1092
        %vm1094 = vcmp.eq.s32.totalorder %v142, 6
        %v1095 = vsel %vm1094, %v1093, %v1087
        %v1096 = vld [vmem:[#allocation6 + $0x6] sm:$0x1]
        %vm1097 = vcmp.eq.f32.partialorder %v873, %v1093
        %v1098 = vsel %vm1097, %v1096, 0.0
        %v1099 = vsel %vm898, %v1098, 0.0
        %1100 = vadd.xlane.f32.xlu0 %v1099
        %v1101 = vpop.xlane.xlu0 %1100
        %vm1102 = vcmp.eq.s32.totalorder %v142, 5
        %v1103 = vsel %vm1102, %v1101, %v1095
        %v1104 = vld [vmem:[#allocation6 + $0x5] sm:$0x1]
        %vm1105 = vcmp.eq.f32.partialorder %v873, %v1101
        %v1106 = vsel %vm1105, %v1104, 0.0
        %v1107 = vsel %vm898, %v1106, 0.0
        %1108 = vadd.xlane.f32.xlu0 %v1107
        %v1109 = vpop.xlane.xlu0 %1108
        %v1110 = vsel %vm874, %v1109, %v1103
        %v1111 = vld [vmem:[#allocation6 + $0x4] sm:$0x1]
        %vm1112 = vcmp.eq.f32.partialorder %v873, %v1109
        %v1113 = vsel %vm1112, %v1111, 0.0
        %v1114 = vsel %vm898, %v1113, 0.0
        %1115 = vadd.xlane.f32.xlu0 %v1114
        %v1116 = vpop.xlane.xlu0 %1115
        %vm1117 = vcmp.eq.s32.totalorder %v142, 3
        %v1118 = vsel %vm1117, %v1116, %v1110
        %v1119 = vld [vmem:[#allocation6 + $0x3] sm:$0x1]
        %vm1120 = vcmp.eq.f32.partialorder %v873, %v1116
        %v1121 = vsel %vm1120, %v1119, 0.0
        %v1122 = vsel %vm898, %v1121, 0.0
        %1123 = vadd.xlane.f32.xlu0 %v1122
        %v1124 = vpop.xlane.xlu0 %1123
        %vm1125 = vcmp.eq.s32.totalorder %v142, 2
        %v1126 = vsel %vm1125, %v1124, %v1118
        %v1127 = vld [vmem:[#allocation6 + $0x2] sm:$0x1]
        %vm1128 = vcmp.eq.f32.partialorder %v873, %v1124
        %v1129 = vsel %vm1128, %v1127, 0.0
        %v1130 = vsel %vm898, %v1129, 0.0
        %1131 = vadd.xlane.f32.xlu0 %v1130
        %v1132 = vpop.xlane.xlu0 %1131
        %vm1133 = vcmp.eq.s32.totalorder %v142, 1
        %v1134 = vsel %vm1133, %v1132, %v1126
        %v1135 = vld [vmem:[#allocation6 + $0x1] sm:$0x1]
        %vm1136 = vcmp.eq.f32.partialorder %v873, %v1132
        %v1137 = vsel %vm1136, %v1135, 0.0
        %v1138 = vsel %vm898, %v1137, 0.0
        %1139 = vadd.xlane.f32.xlu0 %v1138
        %v1140 = vpop.xlane.xlu0 %1139
        %vm1141 = vcmp.eq.s32.totalorder %v142, 0
        %v1142 = vsel %vm1141, %v1140, %v1134
        %v1143 = vld [vmem:[#allocation6] sm:$0x1]
        %vm1144 = vcmp.eq.f32.partialorder %v873, %v1140
        %v1145 = vsel %vm1144, %v1143, 0.0
        %v1146 = vsel %vm898, %v1145, 0.0
        %1147 = vadd.xlane.f32.xlu0 %v1146
        %v1148 = vpop.xlane.xlu0 %1147
        %vm1149 = vcmp.eq.s32.totalorder %v142, 16
        %vm1150 = vcmp.eq.s32.totalorder %v142, 17
        %v1151 = vsel %vm1150, %v1148, %v1142
        %v1152 = vsel %vm1149, %v1080, %v1151
        %v1153 = vperm.slane %v1152, 0
        %v1154 = vsel %vm194, %v1153, 0.0
        %1155 = vst [vmem:[%s134 + $0x8] sm:$0xff] %v1154
        %s1156 = sand.u32 %s71, 1
        %s1157 = scalar_lea.sflag [#allocation8], %s1156
        %s1158 = sand.u32 %s71, 1
        %s1159 = smul.addr %s1158, 16
        %s1160 = scalar_lea.vmem [#allocation7], %s1159
        // Predicated region
        $region29: #{bilstm_crf_device.1} parent=27 // pred_check
          %p1161 = pneg %p81
        $region30: #{bilstm_crf_device.1} parent=27 // pred_check_branch
          %1163 = sbr.rel (%p1161) target = $region32
        $region31: #{bilstm_crf_device.1} parent=27 // pred_region
          %s1164 = smul.u32 2, %s16
          %1166 = vsyncadd %s1157, 0
          %s1167 = smul.addr %s1164, 8
          %s1168 = scalar_lea.hbm %s2, %s1167
          %s1169 = sshll.u32 %s1160, 4
          %s1170 = int_to_ptr.vmem [resolvable:$true] %s1169
          %s1171 = sshll.u32 %s1168, 4
          %s1172 = int_to_ptr.hbm [resolvable:$true] %s1171
          %1177 = dma.vmem_to_hbm [thread:$0]  %s1170, 256, %s1172, %s1157, 128, 128, 8
        $region32: #{bilstm_crf_device.1} parent=27 // pred_fallthru
          _
      $region28: #{bilstm_crf_device.1} parent=5 // pred_fallthru
        _
      %p1178 = scmp.le.s32.totalorder 2, %s11
      // Predicated region
      $region33: #{bilstm_crf_device.1} parent=5 // pred_check
        %p1179 = pneg %p1178
      $region34: #{bilstm_crf_device.1} parent=5 // pred_check_branch
        %1181 = sbr.rel (%p1179) target = $region36
      $region35: #{bilstm_crf_device.1} parent=5 // pred_region
        %s1182 = ssub.s32 %s11, 2
        // Predicated region
        $region37: #{bilstm_crf_device.1} parent=35 // pred_check
          %p1183 = pneg %p87
        $region38: #{bilstm_crf_device.1} parent=35 // pred_check_branch
          %1185 = sbr.rel (%p1183) target = $region40
        $region39: #{bilstm_crf_device.1} parent=35 // pred_region
          %s1186 = sand.u32 %s72, 1
          %s1187 = scalar_lea.sflag [#allocation8], %s1186
          %s1188 = sand.u32 %s72, 1
          %s1189 = smul.addr %s1188, 16
          %s1190 = scalar_lea.vmem [#allocation7], %s1189
          %1192 = dma.done %s1187, 256
        $region40: #{bilstm_crf_device.1} parent=35 // pred_fallthru
          _
      $region36: #{bilstm_crf_device.1} parent=5 // pred_fallthru
        _
    $region6: #{bilstm_crf_device.1} parent=1 // loop_footer
      %s15 = sadd.s32 1, %s11
    $region7: #{bilstm_crf_device.1} parent=1 // loop_footer_branch
      %10 = sbr.rel target = $region3
    $region8: #{bilstm_crf_device.1} parent=1 // loop_exit
      _
    %1193 = vsyncpa [#allocation8], 1
    %s1194 = scalar_lea.sflag [#allocation8], 1
    %1195 = vsyncpa %s1194, 1

</llo_original>
